<compile_context>
chip_gen: v6e
topology: v6e:2x2x1
jax: 0.10.0
libtpu: 0.0.40
codegen_flags: <defaults>
</compile_context>

<pallas_src>
import functools
import numpy as np
import jax
import jax.numpy as jnp
from jax import lax
from jax.experimental import pallas as pl
from jax.experimental.pallas import tpu as pltpu

LANES = 128


class VAEResult:
    def __init__(self, z_distribution, z_sample, x_reconstructed,
                 loss_reconstructed=None, loss_kl=None):
        self.z_distribution = z_distribution
        self.z_sample = z_sample
        self.x_reconstructed = x_reconstructed
        self.loss_reconstructed = loss_reconstructed
        self.loss_kl = loss_kl
        self.total_loss = (
            loss_reconstructed + loss_kl
            if loss_reconstructed is not None and loss_kl is not None
            else None
        )


def _round_up(a, m):
    return ((a + m - 1) // m) * m


def _pick_batch_tile(B):
    """Sublane-aligned batch tile, capped at 256; keep >=2 blocks when possible
    so the 'parallel' batch axis shards across both TensorCores on v7x."""
    bp = _round_up(B, 8)
    tb = min(256, bp)
    if bp // tb < 2 and bp >= 16:
        tb = _round_up((bp + 1) // 2, 8)
    return tb


def _pick_d_tile(D):
    for cand in (512, 256, 128):
        if D % cand == 0:
            return cand
    return D


# ---------------------------------------------------------------------------
# Pallas kernel: grid = (batch_tiles, 2 * nd); nd = D // td
# ---------------------------------------------------------------------------
def vae_kernel(x_ref, eps_ref,
               w1_ref, b1_ref, wml_ref, bml_ref,
               w2_ref, b2_ref, w3_ref, b3_ref,
               lat_ref, xr_ref,
               h_acc, h2_s, racc,
               *, valid_b, tb, z_dim, nd):
    i = pl.program_id(0)
    s = pl.program_id(1)
    f32 = jnp.float32
    bf16 = jnp.bfloat16

    # ----- init (first step of each batch tile) -----
    @pl.when(s == 0)
    def _init():
        h_acc[...] = jnp.zeros_like(h_acc)
        racc[...] = jnp.zeros_like(racc)
        lat_ref[...] = jnp.zeros_like(lat_ref)

    # ----- phase 1: encoder K-reduction over D tiles (bf16 MXU, f32 acc) -----
    @pl.when(s < nd)
    def _encode_partial():
        h_acc[...] += jnp.dot(x_ref[...], w1_ref[...],
                              preferred_element_type=f32)

    # ----- phase boundary: latent heads, reparameterize, decoder hidden -----
    @pl.when(s == nd - 1)
    def _latent():
        h = jnp.maximum(h_acc[...] + b1_ref[...], 0.0)
        # fused [mu | log_sigma2] head: one MXU pass
        ml = jnp.dot(h.astype(bf16), wml_ref[...],
                     preferred_element_type=f32) + bml_ref[...]
        mu = ml[:, :z_dim]
        ls = ml[:, z_dim:]
        # single transcendental; sigma^2 reused for KL
        sigma = jnp.exp(0.5 * ls)
        z = mu + sigma * eps_ref[...]
        h2 = jnp.maximum(jnp.dot(z.astype(bf16), w2_ref[...],
                                 preferred_element_type=f32) + b2_ref[...], 0.0)
        h2_s[...] = h2.astype(h2_s.dtype)

        row = i * tb + lax.broadcasted_iota(jnp.int32, (tb, 1), 0)
        valid = (row < valid_b).astype(f32)
        kl_rows = jnp.sum(1.0 + ls - mu * mu - sigma * sigma,
                          axis=-1, keepdims=True) * valid

        # lane-packed slab: [mu | log_sigma2 | z | recon | kl | 0...]
        lat_ref[:, 0:2 * z_dim] = ml
        lat_ref[:, 2 * z_dim:3 * z_dim] = z
        lat_ref[:, 3 * z_dim + 1:3 * z_dim + 2] = kl_rows

    # ----- phase 2: decoder N-tiled over D + recon-error partials -----
    @pl.when(s >= nd)
    def _decode_tile():
        xr = jnp.dot(h2_s[...], w3_ref[...],
                     preferred_element_type=f32) + b3_ref[...]
        xr_ref[...] = xr.astype(xr_ref.dtype)
        diff = xr - x_ref[...].astype(f32)
        racc[...] += jnp.sum(diff * diff, axis=-1, keepdims=True)

    # ----- finalize: recon partial into the latent slab (padded rows masked) ---
    @pl.when(s == 2 * nd - 1)
    def _finalize():
        row = i * tb + lax.broadcasted_iota(jnp.int32, (tb, 1), 0)
        valid = (row < valid_b).astype(f32)
        lat_ref[:, 3 * z_dim:3 * z_dim + 1] = racc[...] * valid


# ---------------------------------------------------------------------------
# Parameters / wrapper
# ---------------------------------------------------------------------------
def init_params(key, D, H, Z):
    """Deterministic small-scale parameter initialization (no checkpoint load)."""
    ks = jax.random.split(key, 5)
    s = 0.02
    return {
        "w1":  s * jax.random.normal(ks[0], (D, H), jnp.float32),
        "b1":  jnp.zeros((1, H), jnp.float32),
        "wmu": s * jax.random.normal(ks[1], (H, Z), jnp.float32),
        "bmu": jnp.zeros((1, Z), jnp.float32),
        "wls": s * jax.random.normal(ks[2], (H, Z), jnp.float32),
        "bls": jnp.zeros((1, Z), jnp.float32),
        "w2":  s * jax.random.normal(ks[3], (Z, H), jnp.float32),
        "b2":  jnp.zeros((1, H), jnp.float32),
        "w3":  s * jax.random.normal(ks[4], (H, D), jnp.float32),
        "b3":  jnp.zeros((1, D), jnp.float32),
    }


def vae_forward(x_nchw, params, eps, sample_sigma=1.0, compute_loss=True,
                tb=None, td=None, vmem_limit_bytes=48 * 1024 * 1024):
    B = x_nchw.shape[0]
    D = int(np.prod(x_nchw.shape[1:]))
    H = params["w1"].shape[1]
    Z = params["wmu"].shape[1]
    assert D % LANES == 0, "flattened input dim must be a multiple of 128"
    assert 3 * Z + 2 <= LANES, "latent slab packs mu|ls|z|recon|kl into 128 lanes"

    if tb is None:
        tb = _pick_batch_tile(B)
    if td is None:
        td = _pick_d_tile(D)
    assert D % td == 0
    nd = D // td
    Hp = _round_up(H, LANES)          # lane-dense hidden dim (zero padding is exact)

    B_pad = _round_up(B, tb)
    nblk = B_pad // tb

    bf16 = jnp.bfloat16
    f32 = jnp.float32

    # Streaming arrays in bf16 (halves HBM traffic); accumulation stays f32.
    x = x_nchw.reshape(B, D).astype(bf16)
    eps32 = eps.astype(f32)
    if B_pad != B:
        x = jnp.zeros((B_pad, D), bf16).at[:B].set(x)
        eps32 = jnp.zeros((B_pad, Z), f32).at[:B].set(eps32)

    def pad_cols(w, n):
        return w if w.shape[1] == n else jnp.pad(w, ((0, 0), (0, n - w.shape[1])))

    def pad_rows(w, n):
        return w if w.shape[0] == n else jnp.pad(w, ((0, n - w.shape[0]), (0, 0)))

    w1 = pad_cols(params["w1"], Hp).astype(bf16)                       # (D, Hp)
    b1 = pad_cols(params["b1"], Hp).astype(f32)                        # (1, Hp)
    wml = pad_rows(jnp.concatenate([params["wmu"], params["wls"]], axis=1),
                   Hp).astype(bf16)                                    # (Hp, 2Z)
    bml = jnp.concatenate([params["bmu"], params["bls"]], axis=1).astype(f32)
    w2 = pad_cols(params["w2"], Hp).astype(bf16)                       # (Z, Hp)
    b2 = pad_cols(params["b2"], Hp).astype(f32)                        # (1, Hp)
    w3 = pad_rows(params["w3"], Hp).astype(bf16)                       # (Hp, D)
    b3 = params["b3"].astype(f32)                                      # (1, D)

    kernel = functools.partial(vae_kernel, valid_b=B, tb=tb, z_dim=Z, nd=nd)

    in_specs = [
        # x tile is read in both phases (encoder matmul, recon-loss diff).
        pl.BlockSpec((tb, td), lambda i, s: (i, s % nd)),
        pl.BlockSpec((tb, Z), lambda i, s: (i, 0)),
        pl.BlockSpec((td, Hp), lambda i, s: (jnp.minimum(s, nd - 1), 0)),   # w1 streamed
        pl.BlockSpec((1, Hp), lambda i, s: (0, 0)),                         # b1
        pl.BlockSpec((Hp, 2 * Z), lambda i, s: (0, 0)),                     # wmu|wls
        pl.BlockSpec((1, 2 * Z), lambda i, s: (0, 0)),                      # bmu|bls
        pl.BlockSpec((Z, Hp), lambda i, s: (0, 0)),                         # w2
        pl.BlockSpec((1, Hp), lambda i, s: (0, 0)),                         # b2
        pl.BlockSpec((Hp, td), lambda i, s: (0, jnp.maximum(s - nd, 0))),   # w3 streamed
        pl.BlockSpec((1, td), lambda i, s: (0, jnp.maximum(s - nd, 0))),    # b3
    ]
    out_specs = (
        pl.BlockSpec((tb, LANES), lambda i, s: (i, 0)),                     # latent slab
        pl.BlockSpec((tb, td), lambda i, s: (i, jnp.maximum(s - nd, 0))),   # x_recon
    )
    # TODO(synk): weight BlockSpecs could use pipeline_mode=pl.Buffered(1) to
    # halve their resident VMEM footprint on v7x (64 MiB budget).

    lat, xr_p = pl.pallas_call(
        kernel,
        out_shape=(
            jax.ShapeDtypeStruct((B_pad, LANES), f32),   # [mu|ls|z|recon|kl|0] slab
            jax.ShapeDtypeStruct((B_pad, D), bf16),      # x_recon (flat, bf16)
        ),
        grid=(nblk, 2 * nd),
        in_specs=in_specs,
        out_specs=out_specs,
        scratch_shapes=[
            pltpu.VMEM((tb, Hp), f32),    # encoder pre-activation K-accumulator
            pltpu.VMEM((tb, Hp), bf16),   # decoder hidden, reused across D tiles
            pltpu.VMEM((tb, 1), f32),     # per-row recon-error accumulator
        ],
        compiler_params=pltpu.CompilerParams(
            # Batch axis is independent -> shards across both TCs on v7x.
            dimension_semantics=("parallel", "arbitrary"),
            # Sized for v7x's 64 MiB VMEM; can be raised to ~100 MiB on v5e/v6e.
            vmem_limit_bytes=vmem_limit_bytes,
        ),
    )(x, eps32, w1, b1, wml, bml, w2, b2, w3, b3)

    mu = lat[:B, 0:Z]
    log_sigma2 = lat[:B, Z:2 * Z]
    z = lat[:B, 2 * Z:3 * Z]
    x_reconstructed = xr_p[:B].astype(f32).reshape(x_nchw.shape)

    recon_loss, kl_loss = None, None
    if compute_loss:
        recon_err = jnp.sum(lat[:, 3 * Z])        # sum of squared errors (masked)
        kl_sum = jnp.sum(lat[:, 3 * Z + 1])       # sum(1 + ls - mu^2 - sigma^2)
        data_dim = float(D)                       # input_x[0].numel()
        regularization_term = (data_dim / 2.0) * jnp.log(
            jnp.asarray(2.0 * np.pi * sample_sigma ** 2, f32))
        recon_loss = regularization_term - recon_err / (2.0 * sample_sigma ** 2)
        kl_loss = -0.5 * kl_sum

    return VAEResult(
        z_distribution=(mu, log_sigma2),
        z_sample=z,
        x_reconstructed=x_reconstructed,
        loss_reconstructed=recon_loss,
        loss_kl=kl_loss,
    )


if __name__ == "__main__":
    # Small shapes consistent with the module: batch=2, channels=4, spatial=16.
    B, C, HH, WW = 2, 4, 16, 16
    D = C * HH * WW          # 1024  (-> 2 D-tiles of 512: exercises the phases)
    HID = 32                 # encoder/decoder hidden size (padded to 128 lanes)
    Z = 8                    # latent dim

    key = jax.random.PRNGKey(0)
    k_x, k_p, k_eps = jax.random.split(key, 3)

    x = jax.random.normal(k_x, (B, C, HH, WW), jnp.float32)
    params = init_params(k_p, D, HID, Z)
    # torch.randn_like(sigma) equivalent: deterministic standard-normal noise.
    eps = jax.random.normal(k_eps, (B, Z), jnp.float32)

    result = vae_forward(x, params, eps, sample_sigma=1.0, compute_loss=True)
    jax.block_until_ready((result.z_distribution, result.z_sample,
                           result.x_reconstructed, result.loss_reconstructed,
                           result.loss_kl, result.total_loss))

    # Pure-JAX reference with the same bf16-input / bf16-weight / f32-acc math.
    def ref_forward(x_nchw, p, eps_):
        bf = jnp.bfloat16

        def mm(a, w):
            return jnp.dot(a.astype(bf), w.astype(bf),
                           preferred_element_type=jnp.float32)

        xf = x_nchw.reshape(B, D).astype(bf).astype(jnp.float32)  # kernel sees bf16 x
        h = jnp.maximum(mm(xf, p["w1"]) + p["b1"], 0.0)
        mu_ = mm(h, p["wmu"]) + p["bmu"]
        ls_ = mm(h, p["wls"]) + p["bls"]
        z_ = mu_ + jnp.exp(0.5 * ls_) * eps_
        h2 = jnp.maximum(mm(z_, p["w2"]) + p["b2"], 0.0)
        xr_ = mm(h2, p["w3"]) + p["b3"]
        recon_err = jnp.sum((xr_ - xf) ** 2)
        kl = -0.5 * jnp.sum(1.0 + ls_ - mu_ ** 2 - jnp.exp(ls_))
        reg = (D / 2.0) * jnp.log(jnp.asarray(2.0 * np.pi, jnp.float32))
        return (mu_, ls_, z_), xr_.reshape(x_nchw.shape), reg - recon_err / 2.0, kl

    (mu_r, ls_r, z_r), xr_r, rl_r, kl_r = ref_forward(x, params, eps)

    np.testing.assert_allclose(np.asarray(result.z_distribution[0]), np.asarray(mu_r),
                               rtol=1e-3, atol=1e-4)
    np.testing.assert_allclose(np.asarray(result.z_distribution[1]), np.asarray(ls_r),
                               rtol=1e-3, atol=1e-4)
    np.testing.assert_allclose(np.asarray(result.z_sample), np.asarray(z_r),
                               rtol=1e-3, atol=1e-4)
    # x_reconstructed is emitted as bf16 (traffic optimization) -> looser atol.
    np.testing.assert_allclose(np.asarray(result.x_reconstructed), np.asarray(xr_r),
                               rtol=2e-2, atol=1e-3)
    np.testing.assert_allclose(np.asarray(result.loss_reconstructed), np.asarray(rl_r),
                               rtol=5e-3, atol=5e-2)
    np.testing.assert_allclose(np.asarray(result.loss_kl), np.asarray(kl_r),
                               rtol=1e-2, atol=1e-3)

    print("KERNEL_OK")
</pallas_src>

<mosaic_0001>
module attributes {stable_mosaic.version = 11 : i64} {
  func.func @vae_kernel(%arg0: i32, %arg1: i32, %arg2: memref<8x512xbf16, #tpu.memory_space<vmem>>, %arg3: memref<8x8xf32, #tpu.memory_space<vmem>>, %arg4: memref<512x128xbf16, #tpu.memory_space<vmem>>, %arg5: memref<1x128xf32, #tpu.memory_space<vmem>>, %arg6: memref<128x16xbf16, #tpu.memory_space<vmem>>, %arg7: memref<1x16xf32, #tpu.memory_space<vmem>>, %arg8: memref<8x128xbf16, #tpu.memory_space<vmem>>, %arg9: memref<1x128xf32, #tpu.memory_space<vmem>>, %arg10: memref<128x512xbf16, #tpu.memory_space<vmem>>, %arg11: memref<1x512xf32, #tpu.memory_space<vmem>>, %arg12: memref<8x128xf32, #tpu.memory_space<vmem>>, %arg13: memref<8x512xbf16, #tpu.memory_space<vmem>>, %arg14: memref<8x128xf32, #tpu.memory_space<vmem>>, %arg15: memref<8x128xbf16, #tpu.memory_space<vmem>>, %arg16: memref<8x1xf32, #tpu.memory_space<vmem>>) attributes {dimension_semantics = [#tpu.dimension_semantics<parallel>, #tpu.dimension_semantics<arbitrary>], iteration_bounds = array<i64: 1, 4>, scalar_prefetch = 0 : i64, scratch_operands = 3 : i64, tpu.core_type = #tpu.core_type<tc>, window_params = [{transform_indices = @transform_0, window_bounds = array<i64: 8, 512>}, {transform_indices = @transform_1, window_bounds = array<i64: 8, 8>}, {transform_indices = @transform_2, window_bounds = array<i64: 512, 128>}, {pipeline_mode = #tpu.pipeline_mode<synchronous>, transform_indices = @transform_3, window_bounds = array<i64: 1, 128>}, {pipeline_mode = #tpu.pipeline_mode<synchronous>, transform_indices = @transform_4, window_bounds = array<i64: 128, 16>}, {pipeline_mode = #tpu.pipeline_mode<synchronous>, transform_indices = @transform_5, window_bounds = array<i64: 1, 16>}, {pipeline_mode = #tpu.pipeline_mode<synchronous>, transform_indices = @transform_6, window_bounds = array<i64: 8, 128>}, {pipeline_mode = #tpu.pipeline_mode<synchronous>, transform_indices = @transform_7, window_bounds = array<i64: 1, 128>}, {transform_indices = @transform_8, window_bounds = array<i64: 128, 512>}, {transform_indices = @transform_9, window_bounds = array<i64: 1, 512>}, {transform_indices = @transform_10, window_bounds = array<i64: 8, 128>}, {transform_indices = @transform_11, window_bounds = array<i64: 8, 512>}]} {
    %c0_i32 = arith.constant 0 : i32
    %0 = arith.cmpi eq, %arg1, %c0_i32 : i32
    %1 = arith.extui %0 : i1 to i32
    %c0_i32_0 = arith.constant 0 : i32
    %2 = arith.cmpi ne, %1, %c0_i32_0 : i32
    scf.if %2 {
      %cst = arith.constant 0.000000e+00 : f32
      %15 = vector.broadcast %cst : f32 to vector<8x128xf32>
      %c0 = arith.constant 0 : index
      %c0_6 = arith.constant 0 : index
      %16 = vector.load %arg14[%c0, %c0_6] : memref<8x128xf32, #tpu.memory_space<vmem>>, vector<8x128xf32>
      tpu.vector_store %arg14[%c0, %c0_6], %15 {strides = array<i32>} : memref<8x128xf32, #tpu.memory_space<vmem>>, vector<8x128xf32>,
      %cst_7 = arith.constant 0.000000e+00 : f32
      %17 = vector.broadcast %cst_7 : f32 to vector<8x1xf32>
      %c0_8 = arith.constant 0 : index
      %c0_9 = arith.constant 0 : index
      %18 = vector.load %arg16[%c0_8, %c0_9] : memref<8x1xf32, #tpu.memory_space<vmem>>, vector<8x1xf32>
      tpu.vector_store %arg16[%c0_8, %c0_9], %17 {strides = array<i32>} : memref<8x1xf32, #tpu.memory_space<vmem>>, vector<8x1xf32>,
      %cst_10 = arith.constant 0.000000e+00 : f32
      %19 = vector.broadcast %cst_10 : f32 to vector<8x128xf32>
      %c0_11 = arith.constant 0 : index
      %c0_12 = arith.constant 0 : index
      %20 = vector.load %arg12[%c0_11, %c0_12] : memref<8x128xf32, #tpu.memory_space<vmem>>, vector<8x128xf32>
      tpu.vector_store %arg12[%c0_11, %c0_12], %19 {strides = array<i32>} : memref<8x128xf32, #tpu.memory_space<vmem>>, vector<8x128xf32>,
    } else {
    }
    %c2_i32 = arith.constant 2 : i32
    %3 = arith.cmpi slt, %arg1, %c2_i32 : i32
    %4 = arith.extui %3 : i1 to i32
    %c0_i32_1 = arith.constant 0 : i32
    %5 = arith.cmpi ne, %4, %c0_i32_1 : i32
    scf.if %5 {
      %c0 = arith.constant 0 : index
      %c0_6 = arith.constant 0 : index
      %15 = vector.load %arg14[%c0, %c0_6] : memref<8x128xf32, #tpu.memory_space<vmem>>, vector<8x128xf32>
      %c0_7 = arith.constant 0 : index
      %c0_8 = arith.constant 0 : index
      %16 = vector.load %arg2[%c0_7, %c0_8] : memref<8x512xbf16, #tpu.memory_space<vmem>>, vector<8x512xbf16>
      %c0_9 = arith.constant 0 : index
      %c0_10 = arith.constant 0 : index
      %17 = vector.load %arg4[%c0_9, %c0_10] : memref<512x128xbf16, #tpu.memory_space<vmem>>, vector<512x128xbf16>
      %cst = arith.constant dense<0.000000e+00> : vector<8x128xf32>
      %18 = tpu.matmul %16, %17, %cst {dimension_numbers = #tpu.dot_dimension_numbers<[1], [0], [0], [1], [0, 0, 1, 1], [], []>} : vector<8x512xbf16>, vector<512x128xbf16>, vector<8x128xf32> -> vector<8x128xf32>
      %19 = arith.addf %15, %18 : vector<8x128xf32>
      %c0_11 = arith.constant 0 : index
      %c0_12 = arith.constant 0 : index
      %20 = vector.load %arg14[%c0_11, %c0_12] : memref<8x128xf32, #tpu.memory_space<vmem>>, vector<8x128xf32>
      tpu.vector_store %arg14[%c0_11, %c0_12], %19 {strides = array<i32>} : memref<8x128xf32, #tpu.memory_space<vmem>>, vector<8x128xf32>,
    } else {
    }
    %c1_i32 = arith.constant 1 : i32
    %6 = arith.cmpi eq, %arg1, %c1_i32 : i32
    %7 = arith.extui %6 : i1 to i32
    %c0_i32_2 = arith.constant 0 : i32
    %8 = arith.cmpi ne, %7, %c0_i32_2 : i32
    scf.if %8 {
      %c0 = arith.constant 0 : index
      %c0_6 = arith.constant 0 : index
      %15 = vector.load %arg14[%c0, %c0_6] : memref<8x128xf32, #tpu.memory_space<vmem>>, vector<8x128xf32>
      %c0_7 = arith.constant 0 : index
      %c0_8 = arith.constant 0 : index
      %16 = vector.load %arg5[%c0_7, %c0_8] : memref<1x128xf32, #tpu.memory_space<vmem>>, vector<1x128xf32>
      %17 = vector.broadcast %16 : vector<1x128xf32> to vector<8x128xf32>
      %18 = arith.addf %15, %17 : vector<8x128xf32>
      %cst = arith.constant 0.000000e+00 : f32
      %19 = vector.broadcast %cst : f32 to vector<8x128xf32>
      %20 = arith.maximumf %18, %19 : vector<8x128xf32>
      %21 = arith.truncf %20 : vector<8x128xf32> to vector<8x128xbf16>
      %c0_9 = arith.constant 0 : index
      %c0_10 = arith.constant 0 : index
      %22 = vector.load %arg6[%c0_9, %c0_10] : memref<128x16xbf16, #tpu.memory_space<vmem>>, vector<128x16xbf16>
      %cst_11 = arith.constant dense<0.000000e+00> : vector<8x16xf32>
      %23 = tpu.matmul %21, %22, %cst_11 {dimension_numbers = #tpu.dot_dimension_numbers<[1], [0], [0], [1], [0, 0, 1, 1], [], []>} : vector<8x128xbf16>, vector<128x16xbf16>, vector<8x16xf32> -> vector<8x16xf32>
      %c0_12 = arith.constant 0 : index
      %c0_13 = arith.constant 0 : index
      %24 = vector.load %arg7[%c0_12, %c0_13] : memref<1x16xf32, #tpu.memory_space<vmem>>, vector<1x16xf32>
      %25 = vector.broadcast %24 : vector<1x16xf32> to vector<8x16xf32>
      %26 = arith.addf %23, %25 : vector<8x16xf32>
      %27 = vector.extract_strided_slice %26 {offsets = [0, 0], sizes = [8, 8], strides = [1, 1]} : vector<8x16xf32> to vector<8x8xf32>
      %28 = vector.extract_strided_slice %26 {offsets = [0, 8], sizes = [8, 8], strides = [1, 1]} : vector<8x16xf32> to vector<8x8xf32>
      %cst_14 = arith.constant 5.000000e-01 : f32
      %29 = vector.broadcast %cst_14 : f32 to vector<8x8xf32>
      %30 = arith.mulf %29, %28 : vector<8x8xf32>
      %31 = math.exp %30 : vector<8x8xf32>
      %c0_15 = arith.constant 0 : index
      %c0_16 = arith.constant 0 : index
      %32 = vector.load %arg3[%c0_15, %c0_16] : memref<8x8xf32, #tpu.memory_space<vmem>>, vector<8x8xf32>
      %33 = arith.mulf %31, %32 : vector<8x8xf32>
      %34 = arith.addf %27, %33 : vector<8x8xf32>
      %35 = arith.truncf %34 : vector<8x8xf32> to vector<8x8xbf16>
      %c0_17 = arith.constant 0 : index
      %c0_18 = arith.constant 0 : index
      %36 = vector.load %arg8[%c0_17, %c0_18] : memref<8x128xbf16, #tpu.memory_space<vmem>>, vector<8x128xbf16>
      %cst_19 = arith.constant dense<0.000000e+00> : vector<8x128xf32>
      %37 = tpu.matmul %35, %36, %cst_19 {dimension_numbers = #tpu.dot_dimension_numbers<[1], [0], [0], [1], [0, 0, 1, 1], [], []>} : vector<8x8xbf16>, vector<8x128xbf16>, vector<8x128xf32> -> vector<8x128xf32>
      %c0_20 = arith.constant 0 : index
      %c0_21 = arith.constant 0 : index
      %38 = vector.load %arg9[%c0_20, %c0_21] : memref<1x128xf32, #tpu.memory_space<vmem>>, vector<1x128xf32>
      %39 = vector.broadcast %38 : vector<1x128xf32> to vector<8x128xf32>
      %40 = arith.addf %37, %39 : vector<8x128xf32>
      %cst_22 = arith.constant 0.000000e+00 : f32
      %41 = vector.broadcast %cst_22 : f32 to vector<8x128xf32>
      %42 = arith.maximumf %40, %41 : vector<8x128xf32>
      %43 = arith.truncf %42 : vector<8x128xf32> to vector<8x128xbf16>
      %c0_23 = arith.constant 0 : index
      %c0_24 = arith.constant 0 : index
      %44 = vector.load %arg15[%c0_23, %c0_24] : memref<8x128xbf16, #tpu.memory_space<vmem>>, vector<8x128xbf16>
      tpu.vector_store %arg15[%c0_23, %c0_24], %43 {strides = array<i32>} : memref<8x128xbf16, #tpu.memory_space<vmem>>, vector<8x128xbf16>,
      %c8_i32 = arith.constant 8 : i32
      %45 = arith.muli %arg0, %c8_i32 : i32
      %46 = tpu.iota {dimensions = array<i32: 0>} : vector<8x1xi32>
      %47 = vector.broadcast %45 : i32 to vector<8x1xi32>
      %48 = arith.addi %47, %46 : vector<8x1xi32>
      %c2_i32_25 = arith.constant 2 : i32
      %49 = vector.broadcast %c2_i32_25 : i32 to vector<8x1xi32>
      %50 = arith.cmpi slt, %48, %49 : vector<8x1xi32>
      %51 = arith.extui %50 : vector<8x1xi1> to vector<8x1xi32>
      %52 = arith.sitofp %51 : vector<8x1xi32> to vector<8x1xf32>
      %cst_26 = arith.constant 1.000000e+00 : f32
      %53 = vector.broadcast %cst_26 : f32 to vector<8x8xf32>
      %54 = arith.addf %53, %28 : vector<8x8xf32>
      %55 = arith.mulf %27, %27 : vector<8x8xf32>
      %56 = arith.subf %54, %55 : vector<8x8xf32>
      %57 = arith.mulf %31, %31 : vector<8x8xf32>
      %58 = arith.subf %56, %57 : vector<8x8xf32>
      %cst_27 = arith.constant dense<0.000000e+00> : vector<8xf32>
      %59 = vector.multi_reduction <add>, %58, %cst_27 [1] : vector<8x8xf32> to vector<8xf32>
      %60 = vector.shape_cast %59 : vector<8xf32> to vector<8x1xf32>
      %61 = arith.mulf %60, %52 : vector<8x1xf32>
      %c0_28 = arith.constant 0 : index
      %c0_29 = arith.constant 0 : index
      %62 = vector.load %arg12[%c0_28, %c0_29] : memref<8x128xf32, #tpu.memory_space<vmem>>, vector<8x16xf32>
      tpu.vector_store %arg12[%c0_28, %c0_29], %26 {strides = array<i32>} : memref<8x128xf32, #tpu.memory_space<vmem>>, vector<8x16xf32>,
      %c0_30 = arith.constant 0 : index
      %c16 = arith.constant 16 : index
      %63 = vector.load %arg12[%c0_30, %c16] : memref<8x128xf32, #tpu.memory_space<vmem>>, vector<8x8xf32>
      tpu.vector_store %arg12[%c0_30, %c16], %34 {strides = array<i32>} : memref<8x128xf32, #tpu.memory_space<vmem>>, vector<8x8xf32>,
      %c0_31 = arith.constant 0 : index
      %c25 = arith.constant 25 : index
      %64 = vector.load %arg12[%c0_31, %c25] : memref<8x128xf32, #tpu.memory_space<vmem>>, vector<8x1xf32>
      tpu.vector_store %arg12[%c0_31, %c25], %61 {strides = array<i32>} : memref<8x128xf32, #tpu.memory_space<vmem>>, vector<8x1xf32>,
    } else {
    }
    %c2_i32_3 = arith.constant 2 : i32
    %9 = arith.cmpi sge, %arg1, %c2_i32_3 : i32
    %10 = arith.extui %9 : i1 to i32
    %c0_i32_4 = arith.constant 0 : i32
    %11 = arith.cmpi ne, %10, %c0_i32_4 : i32
    scf.if %11 {
      %c0 = arith.constant 0 : index
      %c0_6 = arith.constant 0 : index
      %15 = vector.load %arg15[%c0, %c0_6] : memref<8x128xbf16, #tpu.memory_space<vmem>>, vector<8x128xbf16>
      %c0_7 = arith.constant 0 : index
      %c0_8 = arith.constant 0 : index
      %16 = vector.load %arg10[%c0_7, %c0_8] : memref<128x512xbf16, #tpu.memory_space<vmem>>, vector<128x512xbf16>
      %cst = arith.constant dense<0.000000e+00> : vector<8x512xf32>
      %17 = tpu.matmul %15, %16, %cst {dimension_numbers = #tpu.dot_dimension_numbers<[1], [0], [0], [1], [0, 0, 1, 1], [], []>} : vector<8x128xbf16>, vector<128x512xbf16>, vector<8x512xf32> -> vector<8x512xf32>
      %c0_9 = arith.constant 0 : index
      %c0_10 = arith.constant 0 : index
      %18 = vector.load %arg11[%c0_9, %c0_10] : memref<1x512xf32, #tpu.memory_space<vmem>>, vector<1x512xf32>
      %19 = vector.broadcast %18 : vector<1x512xf32> to vector<8x512xf32>
      %20 = arith.addf %17, %19 : vector<8x512xf32>
      %21 = arith.truncf %20 : vector<8x512xf32> to vector<8x512xbf16>
      %c0_11 = arith.constant 0 : index
      %c0_12 = arith.constant 0 : index
      %22 = vector.load %arg13[%c0_11, %c0_12] : memref<8x512xbf16, #tpu.memory_space<vmem>>, vector<8x512xbf16>
      tpu.vector_store %arg13[%c0_11, %c0_12], %21 {strides = array<i32>} : memref<8x512xbf16, #tpu.memory_space<vmem>>, vector<8x512xbf16>,
      %c0_13 = arith.constant 0 : index
      %c0_14 = arith.constant 0 : index
      %23 = vector.load %arg2[%c0_13, %c0_14] : memref<8x512xbf16, #tpu.memory_space<vmem>>, vector<8x512xbf16>
      %24 = arith.extf %23 : vector<8x512xbf16> to vector<8x512xf32>
      %25 = arith.subf %20, %24 : vector<8x512xf32>
      %c0_15 = arith.constant 0 : index
      %c0_16 = arith.constant 0 : index
      %26 = vector.load %arg16[%c0_15, %c0_16] : memref<8x1xf32, #tpu.memory_space<vmem>>, vector<8x1xf32>
      %27 = arith.mulf %25, %25 : vector<8x512xf32>
      %cst_17 = arith.constant dense<0.000000e+00> : vector<8xf32>
      %28 = vector.multi_reduction <add>, %27, %cst_17 [1] : vector<8x512xf32> to vector<8xf32>
      %29 = vector.shape_cast %28 : vector<8xf32> to vector<8x1xf32>
      %30 = arith.addf %26, %29 : vector<8x1xf32>
      %c0_18 = arith.constant 0 : index
      %c0_19 = arith.constant 0 : index
      %31 = vector.load %arg16[%c0_18, %c0_19] : memref<8x1xf32, #tpu.memory_space<vmem>>, vector<8x1xf32>
      tpu.vector_store %arg16[%c0_18, %c0_19], %30 {strides = array<i32>} : memref<8x1xf32, #tpu.memory_space<vmem>>, vector<8x1xf32>,
    } else {
    }
    %c3_i32 = arith.constant 3 : i32
    %12 = arith.cmpi eq, %arg1, %c3_i32 : i32
    %13 = arith.extui %12 : i1 to i32
    %c0_i32_5 = arith.constant 0 : i32
    %14 = arith.cmpi ne, %13, %c0_i32_5 : i32
    scf.if %14 {
      %c8_i32 = arith.constant 8 : i32
      %15 = arith.muli %arg0, %c8_i32 : i32
      %16 = tpu.iota {dimensions = array<i32: 0>} : vector<8x1xi32>
      %17 = vector.broadcast %15 : i32 to vector<8x1xi32>
      %18 = arith.addi %17, %16 : vector<8x1xi32>
      %c2_i32_6 = arith.constant 2 : i32
      %19 = vector.broadcast %c2_i32_6 : i32 to vector<8x1xi32>
      %20 = arith.cmpi slt, %18, %19 : vector<8x1xi32>
      %21 = arith.extui %20 : vector<8x1xi1> to vector<8x1xi32>
      %22 = arith.sitofp %21 : vector<8x1xi32> to vector<8x1xf32>
      %c0 = arith.constant 0 : index
      %c0_7 = arith.constant 0 : index
      %23 = vector.load %arg16[%c0, %c0_7] : memref<8x1xf32, #tpu.memory_space<vmem>>, vector<8x1xf32>
      %24 = arith.mulf %23, %22 : vector<8x1xf32>
      %c0_8 = arith.constant 0 : index
      %c24 = arith.constant 24 : index
      %25 = vector.load %arg12[%c0_8, %c24] : memref<8x128xf32, #tpu.memory_space<vmem>>, vector<8x1xf32>
      tpu.vector_store %arg12[%c0_8, %c24], %24 {strides = array<i32>} : memref<8x128xf32, #tpu.memory_space<vmem>>, vector<8x1xf32>,
    } else {
    }
    return
  }
  func.func @transform_0(%arg0: i32, %arg1: i32) -> (i32, i32) {
    %c2_i32 = arith.constant 2 : i32
    %c0_i32 = arith.constant 0 : i32
    %0 = arith.cmpi eq, %c2_i32, %c0_i32 : i32
    %c1_i32 = arith.constant 1 : i32
    %1 = arith.select %0, %c1_i32, %c2_i32 : i32
    %2 = arith.remsi %arg1, %1 : i32
    %c0_i32_0 = arith.constant 0 : i32
    %3 = arith.cmpi ne, %2, %c0_i32_0 : i32
    %c0_i32_1 = arith.constant 0 : i32
    %4 = arith.cmpi slt, %2, %c0_i32_1 : i32
    %c0_i32_2 = arith.constant 0 : i32
    %5 = arith.cmpi slt, %1, %c0_i32_2 : i32
    %6 = arith.xori %4, %5 : i1
    %7 = arith.andi %6, %3 : i1
    %8 = arith.addi %2, %1 : i32
    %9 = arith.select %7, %8, %2 : i32
    %c0_i32_3 = arith.constant 0 : i32
    return %arg0, %9 : i32, i32
  }
  func.func @transform_1(%arg0: i32, %arg1: i32) -> (i32, i32) {
    %c0_i32 = arith.constant 0 : i32
    %c0_i32_0 = arith.constant 0 : i32
    return %arg0, %c0_i32 : i32, i32
  }
  func.func @transform_2(%arg0: i32, %arg1: i32) -> (i32, i32) {
    %c1_i32 = arith.constant 1 : i32
    %0 = arith.minsi %arg1, %c1_i32 : i32
    %c0_i32 = arith.constant 0 : i32
    %c0_i32_0 = arith.constant 0 : i32
    return %0, %c0_i32 : i32, i32
  }
  func.func @transform_3(%arg0: i32, %arg1: i32) -> (i32, i32) {
    %c0_i32 = arith.constant 0 : i32
    %c0_i32_0 = arith.constant 0 : i32
    %c0_i32_1 = arith.constant 0 : i32
    return %c0_i32, %c0_i32_0 : i32, i32
  }
  func.func @transform_4(%arg0: i32, %arg1: i32) -> (i32, i32) {
    %c0_i32 = arith.constant 0 : i32
    %c0_i32_0 = arith.constant 0 : i32
    %c0_i32_1 = arith.constant 0 : i32
    return %c0_i32, %c0_i32_0 : i32, i32
  }
  func.func @transform_5(%arg0: i32, %arg1: i32) -> (i32, i32) {
    %c0_i32 = arith.constant 0 : i32
    %c0_i32_0 = arith.constant 0 : i32
    %c0_i32_1 = arith.constant 0 : i32
    return %c0_i32, %c0_i32_0 : i32, i32
  }
  func.func @transform_6(%arg0: i32, %arg1: i32) -> (i32, i32) {
    %c0_i32 = arith.constant 0 : i32
    %c0_i32_0 = arith.constant 0 : i32
    %c0_i32_1 = arith.constant 0 : i32
    return %c0_i32, %c0_i32_0 : i32, i32
  }
  func.func @transform_7(%arg0: i32, %arg1: i32) -> (i32, i32) {
    %c0_i32 = arith.constant 0 : i32
    %c0_i32_0 = arith.constant 0 : i32
    %c0_i32_1 = arith.constant 0 : i32
    return %c0_i32, %c0_i32_0 : i32, i32
  }
  func.func @transform_8(%arg0: i32, %arg1: i32) -> (i32, i32) {
    %c2_i32 = arith.constant 2 : i32
    %0 = arith.subi %arg1, %c2_i32 : i32
    %c0_i32 = arith.constant 0 : i32
    %1 = arith.maxsi %0, %c0_i32 : i32
    %c0_i32_0 = arith.constant 0 : i32
    %c0_i32_1 = arith.constant 0 : i32
    return %c0_i32_0, %1 : i32, i32
  }
  func.func @transform_9(%arg0: i32, %arg1: i32) -> (i32, i32) {
    %c2_i32 = arith.constant 2 : i32
    %0 = arith.subi %arg1, %c2_i32 : i32
    %c0_i32 = arith.constant 0 : i32
    %1 = arith.maxsi %0, %c0_i32 : i32
    %c0_i32_0 = arith.constant 0 : i32
    %c0_i32_1 = arith.constant 0 : i32
    return %c0_i32_0, %1 : i32, i32
  }
  func.func @transform_10(%arg0: i32, %arg1: i32) -> (i32, i32) {
    %c0_i32 = arith.constant 0 : i32
    %c0_i32_0 = arith.constant 0 : i32
    return %arg0, %c0_i32 : i32, i32
  }
  func.func @transform_11(%arg0: i32, %arg1: i32) -> (i32, i32) {
    %c2_i32 = arith.constant 2 : i32
    %0 = arith.subi %arg1, %c2_i32 : i32
    %c0_i32 = arith.constant 0 : i32
    %1 = arith.maxsi %0, %c0_i32 : i32
    %c0_i32_0 = arith.constant 0 : i32
    return %arg0, %1 : i32, i32
  }
}

</mosaic_0001>

<llo_original>
// kernel: tpu_custom_call.1
$region0: #{tpu_custom_call.1}
  #allocation0 [shape = 'u32[]', space=smem, size = 0x4, offset = 0x4, fixed_abs, tag = 'smem constant byte address 0x4 - core index']
  #allocation1 [shape = 'u32[144,128]{1,0:T(1,128)}', space=vmem, size = 0x12000, scoped, tag = 'internal scratch']
  #allocation2 [shape = 'f32[8,128]{1,0:T(8,128)}', space=vmem, size = 0x1000, scoped, tag = 'scratch operand']
  #allocation3 [shape = 'bf16[8,128]{1,0:T(8,128)(2,1)}', space=vmem, size = 0x800, scoped, tag = 'scratch operand']
  #allocation4 [shape = 'f32[8,1]{1,0:T(8,128)}', space=vmem, size = 0x1000, scoped, tag = 'scratch operand']
  %s0 = inlined_call_operand.vmem [shape: bf16[8,1024], index: 0, kind: input, shape index: {}]
  %s1 = inlined_call_operand.vmem [shape: f32[8,8], index: 1, kind: input, shape index: {}]
  %s2 = inlined_call_operand.hbm [shape: bf16[1024,128], index: 2, kind: input, shape index: {}]
  %s3 = inlined_call_operand.vmem [shape: f32[1,128], index: 3, kind: input, shape index: {}]
  %s4 = inlined_call_operand.vmem [shape: bf16[128,16], index: 4, kind: input, shape index: {}]
  %s5 = inlined_call_operand.vmem [shape: f32[1,16], index: 5, kind: input, shape index: {}]
  %s6 = inlined_call_operand.vmem [shape: bf16[8,128], index: 6, kind: input, shape index: {}]
  %s7 = inlined_call_operand.vmem [shape: f32[1,128], index: 7, kind: input, shape index: {}]
  %s8 = inlined_call_operand.hbm [shape: bf16[128,1024], index: 8, kind: input, shape index: {}]
  %s9 = inlined_call_operand.vmem [shape: f32[1,1024], index: 9, kind: input, shape index: {}]
  %s10 = inlined_call_operand.hbm [shape: f32[8,128], index: 10, kind: output, shape index: {0}]
  %s11 = inlined_call_operand.hbm [shape: bf16[8,1024], index: 11, kind: output, shape index: {1}]
  %12 = xla_tuple %s10, %s11
  %s13 = sld [smem:[#allocation0]]
  $region109: #{tpu_custom_call.1} parent=0
    _
  %s15 = ssub.s32 1, %s13
  %s16 = scalar_select 0, %s15, %s13
  $region1: #{tpu_custom_call.1} parent=0
    #allocation5 [shape = 'u8[262144]{0}', space=vmem, size = 0x40000, scoped, tag = 'input window, operand 2']
    #allocation6 [shape = 's32[2]{0}', space=sflag, size = 0x8, scoped, tag = 'scoped memory for tpu_custom_call.1']
    #allocation7 [shape = 's32[2]{0}', space=sflag, size = 0x8, scoped, tag = 'scoped memory for tpu_custom_call.1']
    #allocation8 [shape = 'u8[262144]{0}', space=vmem, size = 0x40000, scoped, tag = 'input window, operand 8']
    #allocation9 [shape = 's32[2]{0}', space=sflag, size = 0x8, scoped, tag = 'scoped memory for tpu_custom_call.1']
    #allocation10 [shape = 'u8[4096]{0}', space=vmem, size = 0x1000, scoped, tag = 'output window, operand 0, single buffered']
    #allocation11 [shape = 'u8[16384]{0}', space=vmem, size = 0x4000, scoped, tag = 'output window, operand 1']
    #allocation12 [shape = 's32[2]{0}', space=sflag, size = 0x8, scoped, tag = 'scoped memory for tpu_custom_call.1']
    %17 = vsyncpa [#allocation6], 0
    %s18 = scalar_lea.sflag [#allocation6], 1
    %19 = vsyncpa %s18, 0
    %20 = vsyncpa [#allocation9], 0
    %s21 = scalar_lea.sflag [#allocation9], 1
    %22 = vsyncpa %s21, 0
    %23 = vsyncpa [#allocation7], 0
    %24 = vsyncpa [#allocation12], 0
    %s25 = scalar_lea.sflag [#allocation12], 1
    %26 = vsyncpa %s25, 0
    loop: start=0, step=1, limit=6
    $region2: #{tpu_custom_call.1} parent=1 // loop_pre_header
      _
    $region3: #{tpu_custom_call.1} parent=1 // loop_header
      %s28 = sphi 0, %s32
      %p29 = scmp.ge.s32.totalorder %s28, 6
      %s35 = sphi 0, %s47
      %s36 = sphi 0, %s43
      %s37 = sphi 0, %s35
      %s38 = sphi 0, %s36
      %s39 = sphi 0, %s37
      %s40 = sphi 0, %s38
      %s76 = sphi 0, %s78
      %s79 = sphi 0, %s76
      %s80 = sphi 0, %s79
      %s96 = sphi 0, %s80
      %s102 = sphi 0, %s104
      %s105 = sphi 0, %s102
      %s106 = sphi 0, %s105
      %s122 = sphi 0, %s106
      %s132 = sphi 0, %s134
      %s135 = sphi 0, %s132
      %s136 = sphi 0, %s135
      %s152 = sphi 0, %s136
      %s156 = sphi 0, %s156
      %s158 = sphi 0, %s156
      %s159 = sphi 0, %s158
      %s173 = sphi 0, %s159
      %s177 = sphi 0, %s177
      %s179 = sphi 0, %s177
      %s180 = sphi 0, %s179
      %s194 = sphi 0, %s180
      %s198 = sphi 0, %s198
      %s200 = sphi 0, %s198
      %s201 = sphi 0, %s200
      %s215 = sphi 0, %s201
      %s219 = sphi 0, %s219
      %s221 = sphi 0, %s219
      %s222 = sphi 0, %s221
      %s236 = sphi 0, %s222
      %s240 = sphi 0, %s240
      %s242 = sphi 0, %s240
      %s243 = sphi 0, %s242
      %s257 = sphi 0, %s243
      %s269 = sphi 0, %s271
      %s272 = sphi 0, %s269
      %s273 = sphi 0, %s272
      %s289 = sphi 0, %s273
      %s301 = sphi 0, %s303
      %s304 = sphi 0, %s301
      %s305 = sphi 0, %s304
      %s321 = sphi 0, %s305
      %s327 = sphi 0, %s329
      %s330 = sphi 0, %s327
      %s331 = sphi 0, %s330
      %s347 = sphi 0, %s331
      %s361 = sphi 0, %s363
      %s364 = sphi 0, %s361
      %s365 = sphi 0, %s364
      %s381 = sphi 0, %s365
    $region4: #{tpu_custom_call.1} parent=1 // loop_header_branch
      %31 = sbr.rel (%p29) target = $region8
    $region5: #{tpu_custom_call.1} parent=1 // loop_body
      %s33 = ssub.s32 %s28, 1
      %s34 = ssub.s32 %s28, 2
      %s41 = sadd.s32 1, %s36
      %p42 = scmp.ge.s32.totalorder %s41, 4
      %s43 = scalar_select %p42, 0, %s41
      %s44 = sadd.s32 1, %s35
      %s45 = scalar_select %p42, %s44, %s35
      %p46 = scmp.ge.s32.totalorder %s45, 1
      %s47 = scalar_select %p46, 0, %s45
      %p48 = scmp.lt.s32.totalorder %s36, 0
      %s49 = ssub.s32 0, %s36
      %s50 = scalar_select %p48, %s49, %s36
      %s51 = sand.u32 %s50, 1
      %s52 = ssub.s32 0, %s51
      %s53 = scalar_select %p48, %s52, %s51
      %p54 = scmp.ne.s32.totalorder %s53, 0
      %p55 = scmp.lt.s32.totalorder %s53, 0
      %p56 = pnand %p55, %p54
      %p57 = pneg %p56
      %s58 = sadd.s32 %s53, 2
      %s59 = scalar_select %p57, %s58, %s53
      %p60 = scmp.lt.s32.totalorder %s43, 0
      %s61 = ssub.s32 0, %s43
      %s62 = scalar_select %p60, %s61, %s43
      %s63 = sand.u32 %s62, 1
      %s64 = ssub.s32 0, %s63
      %s65 = scalar_select %p60, %s64, %s63
      %p66 = scmp.ne.s32.totalorder %s65, 0
      %p67 = scmp.lt.s32.totalorder %s65, 0
      %p68 = pnand %p67, %p66
      %p69 = pneg %p68
      %s70 = sadd.s32 %s65, 2
      %s71 = scalar_select %p69, %s70, %s65
      %s72 = ssub.s32 %s35, %s47
      %s73 = ssub.s32 %s59, %s71
      %s74 = sor.u32 %s72, %s73
      %p75 = scmp.eq.s32.totalorder %s74, 0
      %s77 = sadd.s32 %s76, 1
      %s78 = scalar_select %p75, %s76, %s77
      %p81 = pneg %p75
      %p82 = scmp.eq.s32.totalorder %s28, 3
      %p83 = por %p81, %p82
      %p84 = scmp.ne.s32.totalorder %s76, %s79
      %p85 = scmp.eq.s32.totalorder %s28, 0
      %p86 = por %p84, %p85
      %p87 = scmp.ne.s32.totalorder %s76, %s79
      %p88 = scmp.eq.s32.totalorder %s33, 3
      %p89 = por %p87, %p88
      %p90 = scmp.ne.s32.totalorder %s79, %s80
      %p91 = scmp.eq.s32.totalorder %s33, 0
      %p92 = por %p90, %p91
      %p93 = scmp.ne.s32.totalorder %s79, %s80
      %p94 = scmp.eq.s32.totalorder %s34, 3
      %p95 = por %p93, %p94
      %p97 = scmp.ne.s32.totalorder %s80, %s96
      %p98 = scmp.eq.s32.totalorder %s34, 0
      %p99 = por %p97, %p98
      %s100 = ssub.s32 %s35, %s47
      %p101 = scmp.eq.s32.totalorder %s100, 0
      %s103 = sadd.s32 %s102, 1
      %s104 = scalar_select %p101, %s102, %s103
      %p107 = pneg %p101
      %p108 = scmp.eq.s32.totalorder %s28, 3
      %p109 = por %p107, %p108
      %p110 = scmp.ne.s32.totalorder %s102, %s105
      %p111 = scmp.eq.s32.totalorder %s28, 0
      %p112 = por %p110, %p111
      %p113 = scmp.ne.s32.totalorder %s102, %s105
      %p114 = scmp.eq.s32.totalorder %s33, 3
      %p115 = por %p113, %p114
      %p116 = scmp.ne.s32.totalorder %s105, %s106
      %p117 = scmp.eq.s32.totalorder %s33, 0
      %p118 = por %p116, %p117
      %p119 = scmp.ne.s32.totalorder %s105, %s106
      %p120 = scmp.eq.s32.totalorder %s34, 3
      %p121 = por %p119, %p120
      %p123 = scmp.ne.s32.totalorder %s106, %s122
      %p124 = scmp.eq.s32.totalorder %s34, 0
      %p125 = por %p123, %p124
      %p126 = scmp.lt.s32.totalorder %s36, 1
      %s127 = scalar_select %p126, %s36, 1
      %p128 = scmp.lt.s32.totalorder %s43, 1
      %s129 = scalar_select %p128, %s43, 1
      %s130 = ssub.s32 %s127, %s129
      %p131 = scmp.eq.s32.totalorder %s130, 0
      %s133 = sadd.s32 %s132, 1
      %s134 = scalar_select %p131, %s132, %s133
      %p137 = pneg %p131
      %p138 = scmp.eq.s32.totalorder %s28, 3
      %p139 = por %p137, %p138
      %p140 = scmp.ne.s32.totalorder %s132, %s135
      %p141 = scmp.eq.s32.totalorder %s28, 0
      %p142 = por %p140, %p141
      %p143 = scmp.ne.s32.totalorder %s132, %s135
      %p144 = scmp.eq.s32.totalorder %s33, 3
      %p145 = por %p143, %p144
      %p146 = scmp.ne.s32.totalorder %s135, %s136
      %p147 = scmp.eq.s32.totalorder %s33, 0
      %p148 = por %p146, %p147
      %p149 = scmp.ne.s32.totalorder %s135, %s136
      %p150 = scmp.eq.s32.totalorder %s34, 3
      %p151 = por %p149, %p150
      %p153 = scmp.ne.s32.totalorder %s136, %s152
      %p154 = scmp.eq.s32.totalorder %s34, 0
      %p155 = por %p153, %p154
      %s157 = sadd.s32 %s156, 1
      %p160 = scmp.eq.s32.totalorder %s28, 3
      %p161 = scmp.ne.s32.totalorder %s156, %s158
      %p162 = scmp.eq.s32.totalorder %s28, 0
      %p163 = por %p161, %p162
      %p164 = scmp.ne.s32.totalorder %s156, %s158
      %p165 = scmp.eq.s32.totalorder %s33, 3
      %p166 = por %p164, %p165
      %p167 = scmp.ne.s32.totalorder %s158, %s159
      %p168 = scmp.eq.s32.totalorder %s33, 0
      %p169 = por %p167, %p168
      %p170 = scmp.ne.s32.totalorder %s158, %s159
      %p171 = scmp.eq.s32.totalorder %s34, 3
      %p172 = por %p170, %p171
      %p174 = scmp.ne.s32.totalorder %s159, %s173
      %p175 = scmp.eq.s32.totalorder %s34, 0
      %p176 = por %p174, %p175
      %s178 = sadd.s32 %s177, 1
      %p181 = scmp.eq.s32.totalorder %s28, 3
      %p182 = scmp.ne.s32.totalorder %s177, %s179
      %p183 = scmp.eq.s32.totalorder %s28, 0
      %p184 = por %p182, %p183
      %p185 = scmp.ne.s32.totalorder %s177, %s179
      %p186 = scmp.eq.s32.totalorder %s33, 3
      %p187 = por %p185, %p186
      %p188 = scmp.ne.s32.totalorder %s179, %s180
      %p189 = scmp.eq.s32.totalorder %s33, 0
      %p190 = por %p188, %p189
      %p191 = scmp.ne.s32.totalorder %s179, %s180
      %p192 = scmp.eq.s32.totalorder %s34, 3
      %p193 = por %p191, %p192
      %p195 = scmp.ne.s32.totalorder %s180, %s194
      %p196 = scmp.eq.s32.totalorder %s34, 0
      %p197 = por %p195, %p196
      %s199 = sadd.s32 %s198, 1
      %p202 = scmp.eq.s32.totalorder %s28, 3
      %p203 = scmp.ne.s32.totalorder %s198, %s200
      %p204 = scmp.eq.s32.totalorder %s28, 0
      %p205 = por %p203, %p204
      %p206 = scmp.ne.s32.totalorder %s198, %s200
      %p207 = scmp.eq.s32.totalorder %s33, 3
      %p208 = por %p206, %p207
      %p209 = scmp.ne.s32.totalorder %s200, %s201
      %p210 = scmp.eq.s32.totalorder %s33, 0
      %p211 = por %p209, %p210
      %p212 = scmp.ne.s32.totalorder %s200, %s201
      %p213 = scmp.eq.s32.totalorder %s34, 3
      %p214 = por %p212, %p213
      %p216 = scmp.ne.s32.totalorder %s201, %s215
      %p217 = scmp.eq.s32.totalorder %s34, 0
      %p218 = por %p216, %p217
      %s220 = sadd.s32 %s219, 1
      %p223 = scmp.eq.s32.totalorder %s28, 3
      %p224 = scmp.ne.s32.totalorder %s219, %s221
      %p225 = scmp.eq.s32.totalorder %s28, 0
      %p226 = por %p224, %p225
      %p227 = scmp.ne.s32.totalorder %s219, %s221
      %p228 = scmp.eq.s32.totalorder %s33, 3
      %p229 = por %p227, %p228
      %p230 = scmp.ne.s32.totalorder %s221, %s222
      %p231 = scmp.eq.s32.totalorder %s33, 0
      %p232 = por %p230, %p231
      %p233 = scmp.ne.s32.totalorder %s221, %s222
      %p234 = scmp.eq.s32.totalorder %s34, 3
      %p235 = por %p233, %p234
      %p237 = scmp.ne.s32.totalorder %s222, %s236
      %p238 = scmp.eq.s32.totalorder %s34, 0
      %p239 = por %p237, %p238
      %s241 = sadd.s32 %s240, 1
      %p244 = scmp.eq.s32.totalorder %s28, 3
      %p245 = scmp.ne.s32.totalorder %s240, %s242
      %p246 = scmp.eq.s32.totalorder %s28, 0
      %p247 = por %p245, %p246
      %p248 = scmp.ne.s32.totalorder %s240, %s242
      %p249 = scmp.eq.s32.totalorder %s33, 3
      %p250 = por %p248, %p249
      %p251 = scmp.ne.s32.totalorder %s242, %s243
      %p252 = scmp.eq.s32.totalorder %s33, 0
      %p253 = por %p251, %p252
      %p254 = scmp.ne.s32.totalorder %s242, %s243
      %p255 = scmp.eq.s32.totalorder %s34, 3
      %p256 = por %p254, %p255
      %p258 = scmp.ne.s32.totalorder %s243, %s257
      %p259 = scmp.eq.s32.totalorder %s34, 0
      %p260 = por %p258, %p259
      %s261 = ssub.s32 %s36, 2
      %p262 = scmp.gt.s32.totalorder %s261, 0
      %s263 = scalar_select %p262, %s261, 0
      %s264 = ssub.s32 %s43, 2
      %p265 = scmp.gt.s32.totalorder %s264, 0
      %s266 = scalar_select %p265, %s264, 0
      %s267 = ssub.s32 %s263, %s266
      %p268 = scmp.eq.s32.totalorder %s267, 0
      %s270 = sadd.s32 %s269, 1
      %s271 = scalar_select %p268, %s269, %s270
      %p274 = pneg %p268
      %p275 = scmp.eq.s32.totalorder %s28, 3
      %p276 = por %p274, %p275
      %p277 = scmp.ne.s32.totalorder %s269, %s272
      %p278 = scmp.eq.s32.totalorder %s28, 0
      %p279 = por %p277, %p278
      %p280 = scmp.ne.s32.totalorder %s269, %s272
      %p281 = scmp.eq.s32.totalorder %s33, 3
      %p282 = por %p280, %p281
      %p283 = scmp.ne.s32.totalorder %s272, %s273
      %p284 = scmp.eq.s32.totalorder %s33, 0
      %p285 = por %p283, %p284
      %p286 = scmp.ne.s32.totalorder %s272, %s273
      %p287 = scmp.eq.s32.totalorder %s34, 3
      %p288 = por %p286, %p287
      %p290 = scmp.ne.s32.totalorder %s273, %s289
      %p291 = scmp.eq.s32.totalorder %s34, 0
      %p292 = por %p290, %p291
      %s293 = ssub.s32 %s36, 2
      %p294 = scmp.gt.s32.totalorder %s293, 0
      %s295 = scalar_select %p294, %s293, 0
      %s296 = ssub.s32 %s43, 2
      %p297 = scmp.gt.s32.totalorder %s296, 0
      %s298 = scalar_select %p297, %s296, 0
      %s299 = ssub.s32 %s295, %s298
      %p300 = scmp.eq.s32.totalorder %s299, 0
      %s302 = sadd.s32 %s301, 1
      %s303 = scalar_select %p300, %s301, %s302
      %p306 = pneg %p300
      %p307 = scmp.eq.s32.totalorder %s28, 3
      %p308 = por %p306, %p307
      %p309 = scmp.ne.s32.totalorder %s301, %s304
      %p310 = scmp.eq.s32.totalorder %s28, 0
      %p311 = por %p309, %p310
      %p312 = scmp.ne.s32.totalorder %s301, %s304
      %p313 = scmp.eq.s32.totalorder %s33, 3
      %p314 = por %p312, %p313
      %p315 = scmp.ne.s32.totalorder %s304, %s305
      %p316 = scmp.eq.s32.totalorder %s33, 0
      %p317 = por %p315, %p316
      %p318 = scmp.ne.s32.totalorder %s304, %s305
      %p319 = scmp.eq.s32.totalorder %s34, 3
      %p320 = por %p318, %p319
      %p322 = scmp.ne.s32.totalorder %s305, %s321
      %p323 = scmp.eq.s32.totalorder %s34, 0
      %p324 = por %p322, %p323
      %s325 = ssub.s32 %s35, %s47
      %p326 = scmp.eq.s32.totalorder %s325, 0
      %s328 = sadd.s32 %s327, 1
      %s329 = scalar_select %p326, %s327, %s328
      %p332 = pneg %p326
      %p333 = scmp.eq.s32.totalorder %s28, 3
      %p334 = por %p332, %p333
      %p335 = scmp.ne.s32.totalorder %s327, %s330
      %p336 = scmp.eq.s32.totalorder %s28, 0
      %p337 = por %p335, %p336
      %p338 = scmp.ne.s32.totalorder %s327, %s330
      %p339 = scmp.eq.s32.totalorder %s33, 3
      %p340 = por %p338, %p339
      %p341 = scmp.ne.s32.totalorder %s330, %s331
      %p342 = scmp.eq.s32.totalorder %s33, 0
      %p343 = por %p341, %p342
      %p344 = scmp.ne.s32.totalorder %s330, %s331
      %p345 = scmp.eq.s32.totalorder %s34, 3
      %p346 = por %p344, %p345
      %p348 = scmp.ne.s32.totalorder %s331, %s347
      %p349 = scmp.eq.s32.totalorder %s34, 0
      %p350 = por %p348, %p349
      %s351 = ssub.s32 %s36, 2
      %p352 = scmp.gt.s32.totalorder %s351, 0
      %s353 = scalar_select %p352, %s351, 0
      %s354 = ssub.s32 %s43, 2
      %p355 = scmp.gt.s32.totalorder %s354, 0
      %s356 = scalar_select %p355, %s354, 0
      %s357 = ssub.s32 %s35, %s47
      %s358 = ssub.s32 %s353, %s356
      %s359 = sor.u32 %s357, %s358
      %p360 = scmp.eq.s32.totalorder %s359, 0
      %s362 = sadd.s32 %s361, 1
      %s363 = scalar_select %p360, %s361, %s362
      %p366 = pneg %p360
      %p367 = scmp.eq.s32.totalorder %s28, 3
      %p368 = por %p366, %p367
      %p369 = scmp.ne.s32.totalorder %s361, %s364
      %p370 = scmp.eq.s32.totalorder %s28, 0
      %p371 = por %p369, %p370
      %p372 = scmp.ne.s32.totalorder %s361, %s364
      %p373 = scmp.eq.s32.totalorder %s33, 3
      %p374 = por %p372, %p373
      %p375 = scmp.ne.s32.totalorder %s364, %s365
      %p376 = scmp.eq.s32.totalorder %s33, 0
      %p377 = por %p375, %p376
      %p378 = scmp.ne.s32.totalorder %s364, %s365
      %p379 = scmp.eq.s32.totalorder %s34, 3
      %p380 = por %p378, %p379
      %p382 = scmp.ne.s32.totalorder %s365, %s381
      %p383 = scmp.eq.s32.totalorder %s34, 0
      %p384 = por %p382, %p383
      %p385 = scmp.le.s32.totalorder 1, %s28
      %p386 = scmp.lt.s32.totalorder %s28, 5
      %p387 = pnand %p385, %p386
      %p388 = pneg %p387
      // Predicated region
      $region9: #{tpu_custom_call.1} parent=5 // pred_check
        _
      $region10: #{tpu_custom_call.1} parent=5 // pred_check_branch
        %390 = sbr.rel (%p387) target = $region12
      $region11: #{tpu_custom_call.1} parent=5 // pred_region
        %s391 = ssub.s32 %s28, 1
        // Predicated region
        $region13: #{tpu_custom_call.1} parent=11 // pred_check
          %p392 = pneg %p118
        $region14: #{tpu_custom_call.1} parent=11 // pred_check_branch
          %394 = sbr.rel (%p392) target = $region16
        $region15: #{tpu_custom_call.1} parent=11 // pred_region
          %p395 = scmp.lt.s32.totalorder %s37, 0
          %s396 = scalar_select %p395, %s37, 0
          %s397 = smul.addr %s396, 8
          %s398 = scalar_lea.vmem %s1, %s397
        $region16: #{tpu_custom_call.1} parent=11 // pred_fallthru
          _
        // Predicated region
        $region17: #{tpu_custom_call.1} parent=11 // pred_check
          %p399 = pneg %p169
        $region18: #{tpu_custom_call.1} parent=11 // pred_check_branch
          %401 = sbr.rel (%p399) target = $region20
        $region19: #{tpu_custom_call.1} parent=11 // pred_region
          _
        $region20: #{tpu_custom_call.1} parent=11 // pred_fallthru
          _
        // Predicated region
        $region21: #{tpu_custom_call.1} parent=11 // pred_check
          %p402 = pneg %p190
        $region22: #{tpu_custom_call.1} parent=11 // pred_check_branch
          %404 = sbr.rel (%p402) target = $region24
        $region23: #{tpu_custom_call.1} parent=11 // pred_region
          _
        $region24: #{tpu_custom_call.1} parent=11 // pred_fallthru
          _
        // Predicated region
        $region25: #{tpu_custom_call.1} parent=11 // pred_check
          %p405 = pneg %p211
        $region26: #{tpu_custom_call.1} parent=11 // pred_check_branch
          %407 = sbr.rel (%p405) target = $region28
        $region27: #{tpu_custom_call.1} parent=11 // pred_region
          _
        $region28: #{tpu_custom_call.1} parent=11 // pred_fallthru
          _
        // Predicated region
        $region29: #{tpu_custom_call.1} parent=11 // pred_check
          %p408 = pneg %p232
        $region30: #{tpu_custom_call.1} parent=11 // pred_check_branch
          %410 = sbr.rel (%p408) target = $region32
        $region31: #{tpu_custom_call.1} parent=11 // pred_region
          _
        $region32: #{tpu_custom_call.1} parent=11 // pred_fallthru
          _
        // Predicated region
        $region33: #{tpu_custom_call.1} parent=11 // pred_check
          %p411 = pneg %p253
        $region34: #{tpu_custom_call.1} parent=11 // pred_check_branch
          %413 = sbr.rel (%p411) target = $region36
        $region35: #{tpu_custom_call.1} parent=11 // pred_region
          _
        $region36: #{tpu_custom_call.1} parent=11 // pred_fallthru
          _
      $region12: #{tpu_custom_call.1} parent=5 // pred_fallthru
        _
      %p414 = scmp.lt.s32.totalorder %s28, 4
      // Predicated region
      $region37: #{tpu_custom_call.1} parent=5 // pred_check
        %p415 = pneg %p414
      $region38: #{tpu_custom_call.1} parent=5 // pred_check_branch
        %417 = sbr.rel (%p415) target = $region40
      $region39: #{tpu_custom_call.1} parent=5 // pred_region
        // Predicated region
        $region41: #{tpu_custom_call.1} parent=39 // pred_check
          %p418 = pneg %p86
        $region42: #{tpu_custom_call.1} parent=39 // pred_check_branch
          %420 = sbr.rel (%p418) target = $region44
        $region43: #{tpu_custom_call.1} parent=39 // pred_region
          %p421 = scmp.lt.s32.totalorder %s36, 0
          %s422 = ssub.s32 0, %s36
          %s423 = scalar_select %p421, %s422, %s36
          %s424 = sand.u32 %s423, 1
          %s425 = ssub.s32 0, %s424
          %s426 = scalar_select %p421, %s425, %s424
          %p427 = scmp.ne.s32.totalorder %s426, 0
          %p428 = scmp.lt.s32.totalorder %s426, 0
          %p429 = pnand %p428, %p427
          %p430 = pneg %p429
          %s431 = sadd.s32 %s426, 2
          %s432 = scalar_select %p430, %s431, %s426
          %s433 = smul.u32 4, %s432
          %p434 = scmp.lt.s32.totalorder %s35, 0
          %s435 = scalar_select %p434, %s35, 0
          %p436 = scmp.lt.s32.totalorder %s433, 7
          %s437 = scalar_select %p436, %s433, 7
          %s438 = smul.addr %s435, 8
          %s439 = sadd.s32 %s437, %s438
          %s440 = smul.addr %s439, 4
          %s441 = scalar_lea.vmem %s0, %s440
          %p442 = scmp.lt.s32.totalorder %s36, 0
          %s443 = ssub.s32 0, %s36
          %s444 = scalar_select %p442, %s443, %s36
          %s445 = sand.u32 %s444, 1
          %s446 = ssub.s32 0, %s445
          %s447 = scalar_select %p442, %s446, %s445
          %p448 = scmp.ne.s32.totalorder %s447, 0
          %p449 = scmp.lt.s32.totalorder %s447, 0
          %p450 = pnand %p449, %p448
          %p451 = pneg %p450
          %s452 = sadd.s32 %s447, 2
          %s453 = scalar_select %p451, %s452, %s447
          %s454 = smul.u32 4, %s453
        $region44: #{tpu_custom_call.1} parent=39 // pred_fallthru
          _
        // Predicated region
        $region45: #{tpu_custom_call.1} parent=39 // pred_check
          %p455 = pneg %p142
        $region46: #{tpu_custom_call.1} parent=39 // pred_check_branch
          %457 = sbr.rel (%p455) target = $region48
        $region47: #{tpu_custom_call.1} parent=39 // pred_region
          %s458 = sand.u32 %s132, 1
          %s459 = scalar_lea.sflag [#allocation6], %s458
          %s460 = sand.u32 %s132, 1
          %s461 = smul.addr %s460, 256
          %s462 = scalar_lea.vmem [#allocation5], %s461
          %p463 = scmp.lt.s32.totalorder %s36, 1
          %s464 = scalar_select %p463, %s36, 1
          %s465 = smul.u32 64, %s464
          %s467 = ssub.s32 4096, 4096
          %468 = vsyncadd %s459, %s467
          %s469 = smul.addr %s465, 64
          %s470 = scalar_lea.hbm %s2, %s469
          %s471 = sshll.u32 %s462, 4
          %s472 = int_to_ptr.vmem [resolvable:$true] %s471
          %477 = dma.hbm_to_vmem [thread:$0]  %s470, 4096, %s472, %s459, 64, 64, 4
        $region48: #{tpu_custom_call.1} parent=39 // pred_fallthru
          _
        // Predicated region
        $region49: #{tpu_custom_call.1} parent=39 // pred_check
          %p478 = pneg %p279
        $region50: #{tpu_custom_call.1} parent=39 // pred_check_branch
          %480 = sbr.rel (%p478) target = $region52
        $region51: #{tpu_custom_call.1} parent=39 // pred_region
          %s481 = sand.u32 %s269, 1
          %s482 = scalar_lea.sflag [#allocation9], %s481
          %s483 = sand.u32 %s269, 1
          %s484 = smul.addr %s483, 256
          %s485 = scalar_lea.vmem [#allocation8], %s484
          %s486 = ssub.s32 %s36, 2
          %p487 = scmp.gt.s32.totalorder %s486, 0
          %s488 = scalar_select %p487, %s486, 0
          %s489 = smul.u32 4, %s488
          %s491 = ssub.s32 4096, 4096
          %492 = vsyncadd %s482, %s491
          %s493 = smul.addr %s489, 64
          %s494 = scalar_lea.hbm %s8, %s493
          %s495 = sshll.u32 %s485, 4
          %s496 = int_to_ptr.vmem [resolvable:$true] %s495
          %501 = dma.hbm_to_vmem [thread:$0]  %s494, 4096, %s496, %s482, 512, 256, 16
        $region52: #{tpu_custom_call.1} parent=39 // pred_fallthru
          _
        // Predicated region
        $region53: #{tpu_custom_call.1} parent=39 // pred_check
          %p502 = pneg %p311
        $region54: #{tpu_custom_call.1} parent=39 // pred_check_branch
          %504 = sbr.rel (%p502) target = $region56
        $region55: #{tpu_custom_call.1} parent=39 // pred_region
          %s505 = ssub.s32 %s36, 2
          %p506 = scmp.gt.s32.totalorder %s505, 0
          %s507 = scalar_select %p506, %s505, 0
          %s508 = smul.u32 4, %s507
          %p509 = scmp.lt.s32.totalorder %s508, 7
          %s510 = scalar_select %p509, %s508, 7
          %s511 = scalar_lea.vmem %s9, %s510
          %s512 = ssub.s32 %s36, 2
          %p513 = scmp.gt.s32.totalorder %s512, 0
          %s514 = scalar_select %p513, %s512, 0
          %s515 = smul.u32 4, %s514
        $region56: #{tpu_custom_call.1} parent=39 // pred_fallthru
          _
      $region40: #{tpu_custom_call.1} parent=5 // pred_fallthru
        _
      %p516 = scmp.le.s32.totalorder 1, %s28
      %p517 = scmp.lt.s32.totalorder %s28, 5
      %p518 = pnand %p516, %p517
      %p519 = pneg %p518
      // Predicated region
      $region57: #{tpu_custom_call.1} parent=5 // pred_check
        _
      $region58: #{tpu_custom_call.1} parent=5 // pred_check_branch
        %521 = sbr.rel (%p518) target = $region60
      $region59: #{tpu_custom_call.1} parent=5 // pred_region
        %s522 = ssub.s32 %s28, 1
        %s523 = sand.u32 %s135, 1
        %s524 = scalar_lea.sflag [#allocation6], %s523
        %s525 = sand.u32 %s135, 1
        %s526 = smul.addr %s525, 256
        %s527 = scalar_lea.vmem [#allocation5], %s526
        // Predicated region
        $region61: #{tpu_custom_call.1} parent=59 // pred_check
          %p528 = pneg %p148
        $region62: #{tpu_custom_call.1} parent=59 // pred_check_branch
          %530 = sbr.rel (%p528) target = $region64
        $region63: #{tpu_custom_call.1} parent=59 // pred_region
          %531 = dma.done %s524, 4096
        $region64: #{tpu_custom_call.1} parent=59 // pred_fallthru
          _
        %s532 = sand.u32 %s272, 1
        %s533 = scalar_lea.sflag [#allocation9], %s532
        %s534 = sand.u32 %s272, 1
        %s535 = smul.addr %s534, 256
        %s536 = scalar_lea.vmem [#allocation8], %s535
        // Predicated region
        $region65: #{tpu_custom_call.1} parent=59 // pred_check
          %p537 = pneg %p285
        $region66: #{tpu_custom_call.1} parent=59 // pred_check_branch
          %539 = sbr.rel (%p537) target = $region68
        $region67: #{tpu_custom_call.1} parent=59 // pred_region
          %540 = dma.done %s533, 4096
        $region68: #{tpu_custom_call.1} parent=59 // pred_fallthru
          _
        %p541 = scmp.lt.s32.totalorder %s38, 0
        %s542 = ssub.s32 0, %s38
        %s543 = scalar_select %p541, %s542, %s38
        %s544 = sand.u32 %s543, 1
        %s545 = ssub.s32 0, %s544
        %s546 = scalar_select %p541, %s545, %s544
        %p547 = scmp.ne.s32.totalorder %s546, 0
        %p548 = scmp.lt.s32.totalorder %s546, 0
        %p549 = pnand %p548, %p547
        %p550 = pneg %p549
        %s551 = sadd.s32 %s546, 2
        %s552 = scalar_select %p550, %s551, %s546
        %s553 = smul.u32 4, %s552
        %p554 = scmp.lt.s32.totalorder %s37, 0
        %s555 = scalar_select %p554, %s37, 0
        %p556 = scmp.lt.s32.totalorder %s553, 7
        %s557 = scalar_select %p556, %s553, 7
        %s558 = smul.addr %s555, 8
        %s559 = sadd.s32 %s557, %s558
        %s560 = smul.addr %s559, 4
        %s561 = scalar_lea.vmem %s0, %s560
        %p562 = pneg %p92
        %p563 = pneg %p89
        %p564 = scmp.lt.s32.totalorder %s37, 0
        %s565 = scalar_select %p564, %s37, 0
        %s566 = smul.addr %s565, 8
        %s567 = scalar_lea.vmem %s1, %s566
        %p568 = pneg %p118
        %p569 = pneg %p115
        %s570 = sand.u32 %s135, 1
        %s571 = scalar_lea.sflag [#allocation6], %s570
        %s572 = sand.u32 %s135, 1
        %s573 = smul.addr %s572, 256
        %s574 = scalar_lea.vmem [#allocation5], %s573
        %p575 = pneg %p148
        %p576 = pneg %p145
        %p577 = pneg %p169
        %p578 = pneg %p166
        %p579 = pneg %p190
        %p580 = pneg %p187
        %p581 = pneg %p211
        %p582 = pneg %p208
        %p583 = pneg %p232
        %p584 = pneg %p229
        %p585 = pneg %p253
        %p586 = pneg %p250
        %s587 = sand.u32 %s272, 1
        %s588 = scalar_lea.sflag [#allocation9], %s587
        %s589 = sand.u32 %s272, 1
        %s590 = smul.addr %s589, 256
        %s591 = scalar_lea.vmem [#allocation8], %s590
        %p592 = pneg %p285
        %p593 = pneg %p282
        %s594 = ssub.s32 %s38, 2
        %p595 = scmp.gt.s32.totalorder %s594, 0
        %s596 = scalar_select %p595, %s594, 0
        %s597 = smul.u32 4, %s596
        %p598 = scmp.lt.s32.totalorder %s597, 7
        %s599 = scalar_select %p598, %s597, 7
        %s600 = scalar_lea.vmem %s9, %s599
        %p601 = pneg %p317
        %p602 = pneg %p314
        %p603 = pneg %p343
        %p604 = pneg %p340
        %p605 = pneg %p377
        %p606 = pneg %p374
        %s607 = sand.u32 %s364, 1
        %s608 = scalar_lea.sflag [#allocation12], %s607
        %s609 = sand.u32 %s364, 1
        %s610 = smul.addr %s609, 16
        %s611 = scalar_lea.vmem [#allocation11], %s610
        %p612 = scmp.lt.s32.totalorder %s38, 0
        %s613 = ssub.s32 0, %s38
        %s614 = scalar_select %p612, %s613, %s38
        %s615 = sand.u32 %s614, 1
        %s616 = ssub.s32 0, %s615
        %s617 = scalar_select %p612, %s616, %s615
        %p618 = scmp.ne.s32.totalorder %s617, 0
        %p619 = scmp.lt.s32.totalorder %s617, 0
        %p620 = pnand %p619, %p618
        %p621 = pneg %p620
        %s622 = sadd.s32 %s617, 2
        %s623 = scalar_select %p621, %s622, %s617
        %s624 = smul.u32 4, %s623
        %p625 = scmp.lt.s32.totalorder %s37, 0
        %s626 = scalar_select %p625, %s37, 0
        %p627 = scmp.lt.s32.totalorder %s624, 7
        %s628 = scalar_select %p627, %s624, 7
        %s629 = smul.addr %s626, 8
        %s630 = sadd.s32 %s628, %s629
        %s631 = smul.addr %s630, 4
        %s632 = scalar_lea.vmem %s0, %s631
        %p633 = scmp.lt.s32.totalorder %s38, 0
        %s634 = ssub.s32 0, %s38
        %s635 = scalar_select %p633, %s634, %s38
        %s636 = sand.u32 %s635, 1
        %s637 = ssub.s32 0, %s636
        %s638 = scalar_select %p633, %s637, %s636
        %p639 = scmp.ne.s32.totalorder %s638, 0
        %p640 = scmp.lt.s32.totalorder %s638, 0
        %p641 = pnand %p640, %p639
        %p642 = pneg %p641
        %s643 = sadd.s32 %s638, 2
        %s644 = scalar_select %p642, %s643, %s638
        %s645 = smul.u32 4, %s644
        %p646 = scmp.lt.s32.totalorder %s37, 0
        %s647 = scalar_select %p646, %s37, 0
        %s648 = smul.addr %s647, 8
        %s649 = scalar_lea.vmem %s1, %s648
        %p650 = scmp.lt.s32.totalorder %s38, 1
        %s651 = scalar_select %p650, %s38, 1
        %s652 = smul.u32 64, %s651
        %s653 = ssub.s32 %s38, 2
        %p654 = scmp.gt.s32.totalorder %s653, 0
        %s655 = scalar_select %p654, %s653, 0
        %s656 = smul.u32 4, %s655
        %s657 = ssub.s32 %s38, 2
        %p658 = scmp.gt.s32.totalorder %s657, 0
        %s659 = scalar_select %p658, %s657, 0
        %s660 = smul.u32 4, %s659
        %p661 = scmp.lt.s32.totalorder %s660, 7
        %s662 = scalar_select %p661, %s660, 7
        %s663 = scalar_lea.vmem %s9, %s662
        %s664 = ssub.s32 %s38, 2
        %p665 = scmp.gt.s32.totalorder %s664, 0
        %s666 = scalar_select %p665, %s664, 0
        %s667 = smul.u32 4, %s666
        %s668 = ssub.s32 %s38, 2
        %p669 = scmp.gt.s32.totalorder %s668, 0
        %s670 = scalar_select %p669, %s668, 0
        %s671 = smul.u32 4, %s670
        %p673 = scmp.eq.s32.totalorder %s38, 0
        // Predicated region
        $region69: #{tpu_custom_call.1} parent=59 // pred_check
          %p674 = pneg %p673
        $region70: #{tpu_custom_call.1} parent=59 // pred_check_branch
          %676 = sbr.rel (%p674) target = $region72
        $region71: #{tpu_custom_call.1} parent=59 // pred_region
          %677 = vst [vmem:[#allocation2] sm:$0xff] 0.0
          %vm678 = vcmask 7168
          %679 = vst.msk [vmem:[#allocation4] sm:$0xff] %vm678, 0.0
          %680 = vst [vmem:[#allocation10] sm:$0xff] 0.0
        $region72: #{tpu_custom_call.1} parent=59 // pred_fallthru
          _
        %p681 = scmp.lt.s32.totalorder %s38, 2
        // Predicated region
        $region73: #{tpu_custom_call.1} parent=59 // pred_check
          %p682 = pneg %p681
        $region74: #{tpu_custom_call.1} parent=59 // pred_check_branch
          %684 = sbr.rel (%p682) target = $region76
        $region75: #{tpu_custom_call.1} parent=59 // pred_region
          %v685 = vld [vmem:[#allocation2] sm:$0xff]
          %v686 = vld [vmem:[%s632] sm:$0xff]
          %v687 = vld [vmem:[%s632 + $0x8] sm:$0xff]
          %v688 = vld [vmem:[%s527] sm:$0xf]
          %v689 = vld [vmem:[%s527 + $0x4] sm:$0xf]
          %v690 = vld [vmem:[%s527 + $0x8] sm:$0xf]
          %v691 = vld [vmem:[%s527 + $0xc] sm:$0xf]
          %v692 = vld [vmem:[%s527 + $0x10] sm:$0xf]
          %v693 = vld [vmem:[%s527 + $0x14] sm:$0xf]
          %v694 = vld [vmem:[%s527 + $0x18] sm:$0xf]
          %v695 = vld [vmem:[%s527 + $0x1c] sm:$0xf]
          %v696 = vld [vmem:[%s527 + $0x20] sm:$0xf]
          %v697 = vld [vmem:[%s527 + $0x24] sm:$0xf]
          %v698 = vld [vmem:[%s527 + $0x28] sm:$0xf]
          %v699 = vld [vmem:[%s527 + $0x2c] sm:$0xf]
          %v700 = vld [vmem:[%s527 + $0x30] sm:$0xf]
          %v701 = vld [vmem:[%s527 + $0x34] sm:$0xf]
          %v702 = vld [vmem:[%s527 + $0x38] sm:$0xf]
          %v703 = vld [vmem:[%s527 + $0x3c] sm:$0xf]
          %v704 = vld [vmem:[%s527 + $0x40] sm:$0xf]
          %v705 = vld [vmem:[%s527 + $0x44] sm:$0xf]
          %v706 = vld [vmem:[%s527 + $0x48] sm:$0xf]
          %v707 = vld [vmem:[%s527 + $0x4c] sm:$0xf]
          %v708 = vld [vmem:[%s527 + $0x50] sm:$0xf]
          %v709 = vld [vmem:[%s527 + $0x54] sm:$0xf]
          %v710 = vld [vmem:[%s527 + $0x58] sm:$0xf]
          %v711 = vld [vmem:[%s527 + $0x5c] sm:$0xf]
          %v712 = vld [vmem:[%s527 + $0x60] sm:$0xf]
          %v713 = vld [vmem:[%s527 + $0x64] sm:$0xf]
          %v714 = vld [vmem:[%s527 + $0x68] sm:$0xf]
          %v715 = vld [vmem:[%s527 + $0x6c] sm:$0xf]
          %v716 = vld [vmem:[%s527 + $0x70] sm:$0xf]
          %v717 = vld [vmem:[%s527 + $0x74] sm:$0xf]
          %v718 = vld [vmem:[%s527 + $0x78] sm:$0xf]
          %v719 = vld [vmem:[%s527 + $0x7c] sm:$0xf]
          %v720 = vld [vmem:[%s527 + $0x80] sm:$0xf]
          %v721 = vld [vmem:[%s527 + $0x84] sm:$0xf]
          %v722 = vld [vmem:[%s527 + $0x88] sm:$0xf]
          %v723 = vld [vmem:[%s527 + $0x8c] sm:$0xf]
          %v724 = vld [vmem:[%s527 + $0x90] sm:$0xf]
          %v725 = vld [vmem:[%s527 + $0x94] sm:$0xf]
          %v726 = vld [vmem:[%s527 + $0x98] sm:$0xf]
          %v727 = vld [vmem:[%s527 + $0x9c] sm:$0xf]
          %v728 = vld [vmem:[%s527 + $0xa0] sm:$0xf]
          %v729 = vld [vmem:[%s527 + $0xa4] sm:$0xf]
          %v730 = vld [vmem:[%s527 + $0xa8] sm:$0xf]
          %v731 = vld [vmem:[%s527 + $0xac] sm:$0xf]
          %v732 = vld [vmem:[%s527 + $0xb0] sm:$0xf]
          %v733 = vld [vmem:[%s527 + $0xb4] sm:$0xf]
          %v734 = vld [vmem:[%s527 + $0xb8] sm:$0xf]
          %v735 = vld [vmem:[%s527 + $0xbc] sm:$0xf]
          %v736 = vld [vmem:[%s527 + $0xc0] sm:$0xf]
          %v737 = vld [vmem:[%s527 + $0xc4] sm:$0xf]
          %v738 = vld [vmem:[%s527 + $0xc8] sm:$0xf]
          %v739 = vld [vmem:[%s527 + $0xcc] sm:$0xf]
          %v740 = vld [vmem:[%s527 + $0xd0] sm:$0xf]
          %v741 = vld [vmem:[%s527 + $0xd4] sm:$0xf]
          %v742 = vld [vmem:[%s527 + $0xd8] sm:$0xf]
          %v743 = vld [vmem:[%s527 + $0xdc] sm:$0xf]
          %v744 = vld [vmem:[%s527 + $0xe0] sm:$0xf]
          %v745 = vld [vmem:[%s527 + $0xe4] sm:$0xf]
          %v746 = vld [vmem:[%s527 + $0xe8] sm:$0xf]
          %v747 = vld [vmem:[%s527 + $0xec] sm:$0xf]
          %v748 = vld [vmem:[%s527 + $0xf0] sm:$0xf]
          %v749 = vld [vmem:[%s527 + $0xf4] sm:$0xf]
          %v750 = vld [vmem:[%s527 + $0xf8] sm:$0xf]
          %v751 = vld [vmem:[%s527 + $0xfc] sm:$0xf]
          %v754 = vunpack.c.l.b16 %v686
          %v755 = vunpack.c.h.b16 %v686
          %v756 = vunpack.c.l.b16 %v687
          %v757 = vunpack.c.h.b16 %v687
          %v758 = vpack.c.b16 %v754, %v754
          %v759 = vpack.c.b16 %v755, %v755
          %v760 = vpack.c.b16 %v756, %v756
          %v761 = vpack.c.b16 %v757, %v757
          %v830 = vunpack.c.l.b16 %v688
          %v831 = vunpack.c.l.b16 %v689
          %v832 = vunpack.c.l.b16 %v690
          %v833 = vunpack.c.l.b16 %v691
          %v834 = vunpack.c.l.b16 %v692
          %v835 = vunpack.c.l.b16 %v693
          %v836 = vunpack.c.l.b16 %v694
          %v837 = vunpack.c.l.b16 %v695
          %v838 = vunpack.c.l.b16 %v696
          %v839 = vunpack.c.l.b16 %v697
          %v840 = vunpack.c.l.b16 %v698
          %v841 = vunpack.c.l.b16 %v699
          %v842 = vunpack.c.l.b16 %v700
          %v843 = vunpack.c.l.b16 %v701
          %v844 = vunpack.c.l.b16 %v702
          %v845 = vunpack.c.l.b16 %v703
          %v846 = vunpack.c.l.b16 %v704
          %v847 = vunpack.c.l.b16 %v705
          %v848 = vunpack.c.l.b16 %v706
          %v849 = vunpack.c.l.b16 %v707
          %v850 = vunpack.c.l.b16 %v708
          %v851 = vunpack.c.l.b16 %v709
          %v852 = vunpack.c.l.b16 %v710
          %v853 = vunpack.c.l.b16 %v711
          %v854 = vunpack.c.l.b16 %v712
          %v855 = vunpack.c.l.b16 %v713
          %v856 = vunpack.c.l.b16 %v714
          %v857 = vunpack.c.l.b16 %v715
          %v858 = vunpack.c.l.b16 %v716
          %v859 = vunpack.c.l.b16 %v717
          %v860 = vunpack.c.l.b16 %v718
          %v861 = vunpack.c.l.b16 %v719
          %v862 = vunpack.c.l.b16 %v720
          %v863 = vunpack.c.l.b16 %v721
          %v864 = vunpack.c.l.b16 %v722
          %v865 = vunpack.c.l.b16 %v723
          %v866 = vunpack.c.l.b16 %v724
          %v867 = vunpack.c.l.b16 %v725
          %v868 = vunpack.c.l.b16 %v726
          %v869 = vunpack.c.l.b16 %v727
          %v870 = vunpack.c.l.b16 %v728
          %v871 = vunpack.c.l.b16 %v729
          %v872 = vunpack.c.l.b16 %v730
          %v873 = vunpack.c.l.b16 %v731
          %v874 = vunpack.c.l.b16 %v732
          %v875 = vunpack.c.l.b16 %v733
          %v876 = vunpack.c.l.b16 %v734
          %v877 = vunpack.c.l.b16 %v735
          %v878 = vunpack.c.l.b16 %v736
          %v879 = vunpack.c.l.b16 %v737
          %v880 = vunpack.c.l.b16 %v738
          %v881 = vunpack.c.l.b16 %v739
          %v882 = vunpack.c.l.b16 %v740
          %v883 = vunpack.c.l.b16 %v741
          %v884 = vunpack.c.l.b16 %v742
          %v885 = vunpack.c.l.b16 %v743
          %v886 = vunpack.c.l.b16 %v744
          %v887 = vunpack.c.l.b16 %v745
          %v888 = vunpack.c.l.b16 %v746
          %v889 = vunpack.c.l.b16 %v747
          %v890 = vunpack.c.l.b16 %v748
          %v891 = vunpack.c.l.b16 %v749
          %v892 = vunpack.c.l.b16 %v750
          %v893 = vunpack.c.l.b16 %v751
          %v894 = vpack.c.b16 %v831, %v830
          %v895 = vpack.c.b16 %v833, %v832
          %v896 = vpack.c.b16 %v835, %v834
          %v897 = vpack.c.b16 %v837, %v836
          %v898 = vpack.c.b16 %v839, %v838
          %v899 = vpack.c.b16 %v841, %v840
          %v900 = vpack.c.b16 %v843, %v842
          %v901 = vpack.c.b16 %v845, %v844
          %v902 = vpack.c.b16 %v847, %v846
          %v903 = vpack.c.b16 %v849, %v848
          %v904 = vpack.c.b16 %v851, %v850
          %v905 = vpack.c.b16 %v853, %v852
          %v906 = vpack.c.b16 %v855, %v854
          %v907 = vpack.c.b16 %v857, %v856
          %v908 = vpack.c.b16 %v859, %v858
          %v909 = vpack.c.b16 %v861, %v860
          %v910 = vpack.c.b16 %v863, %v862
          %v911 = vpack.c.b16 %v865, %v864
          %v912 = vpack.c.b16 %v867, %v866
          %v913 = vpack.c.b16 %v869, %v868
          %v914 = vpack.c.b16 %v871, %v870
          %v915 = vpack.c.b16 %v873, %v872
          %v916 = vpack.c.b16 %v875, %v874
          %v917 = vpack.c.b16 %v877, %v876
          %v918 = vpack.c.b16 %v879, %v878
          %v919 = vpack.c.b16 %v881, %v880
          %v920 = vpack.c.b16 %v883, %v882
          %v921 = vpack.c.b16 %v885, %v884
          %v922 = vpack.c.b16 %v887, %v886
          %v923 = vpack.c.b16 %v889, %v888
          %v924 = vpack.c.b16 %v891, %v890
          %v925 = vpack.c.b16 %v893, %v892
          %958 = vmatprep.subr.bf16.mxu0 0
          %959 = vmatpush1.bf16.msra.mxu0 %v901
          %960 = vmatprep.subr.bf16.mxu0 0
          %961 = vmatpush1.bf16.msra.mxu0 %v900
          %962 = vmatprep.subr.bf16.mxu0 0
          %963 = vmatpush1.bf16.msra.mxu0 %v899
          %964 = vmatprep.subr.bf16.mxu0 0
          %965 = vmatpush1.bf16.msra.mxu0 %v898
          %966 = vmatprep.subr.bf16.mxu0 0
          %967 = vmatpush1.bf16.msra.mxu0 %v897
          %968 = vmatprep.subr.bf16.mxu0 0
          %969 = vmatpush1.bf16.msra.mxu0 %v896
          %970 = vmatprep.subr.bf16.mxu0 0
          %971 = vmatpush1.bf16.msra.mxu0 %v895
          %972 = vmatprep.subr.bf16.mxu0 0
          %973 = vmatpush1.bf16.msra.mxu0 %v894
          %974 = vmatprep.subr.bf16.mxu0 0
          %975 = vmatpush2.bf16.msra.mxu0 %v909
          %976 = vmatprep.subr.bf16.mxu0 0
          %977 = vmatpush2.bf16.msra.mxu0 %v908
          %978 = vmatprep.subr.bf16.mxu0 0
          %979 = vmatpush2.bf16.msra.mxu0 %v907
          %980 = vmatprep.subr.bf16.mxu0 0
          %981 = vmatpush2.bf16.msra.mxu0 %v906
          %982 = vmatprep.subr.bf16.mxu0 0
          %983 = vmatpush2.bf16.msra.mxu0 %v905
          %984 = vmatprep.subr.bf16.mxu0 0
          %985 = vmatpush2.bf16.msra.mxu0 %v904
          %986 = vmatprep.subr.bf16.mxu0 0
          %987 = vmatpush2.bf16.msra.mxu0 %v903
          %988 = vmatprep.subr.bf16.mxu0 0
          %989 = vmatpush2.bf16.msra.mxu0 %v902
          %990 = vmatprep.mubr.bf16.mxu0 %v759
          %991 = vmatmul.mubr.bf16.gmra.mxu0 %v758
          %v992 = vpop.f32.mrf.mxu0
          %v993 = vadd.f32 0.0, %v992
          %v994 = vpop.f32.mrf.mxu0
          %v995 = vpop.f32.mrf.mxu0
          %v996 = vpop.f32.mrf.mxu0
          %997 = vdwg.mxu0
          %998 = vmatprep.subr.bf16.mxu0 0
          %999 = vmatpush1.bf16.msra.mxu0 %v917
          %1000 = vmatprep.subr.bf16.mxu0 0
          %1001 = vmatpush1.bf16.msra.mxu0 %v916
          %1002 = vmatprep.subr.bf16.mxu0 0
          %1003 = vmatpush1.bf16.msra.mxu0 %v915
          %1004 = vmatprep.subr.bf16.mxu0 0
          %1005 = vmatpush1.bf16.msra.mxu0 %v914
          %1006 = vmatprep.subr.bf16.mxu0 0
          %1007 = vmatpush1.bf16.msra.mxu0 %v913
          %1008 = vmatprep.subr.bf16.mxu0 0
          %1009 = vmatpush1.bf16.msra.mxu0 %v912
          %1010 = vmatprep.subr.bf16.mxu0 0
          %1011 = vmatpush1.bf16.msra.mxu0 %v911
          %1012 = vmatprep.subr.bf16.mxu0 0
          %1013 = vmatpush1.bf16.msra.mxu0 %v910
          %1014 = vmatprep.subr.bf16.mxu0 0
          %1015 = vmatpush2.bf16.msra.mxu0 %v925
          %1016 = vmatprep.subr.bf16.mxu0 0
          %1017 = vmatpush2.bf16.msra.mxu0 %v924
          %1018 = vmatprep.subr.bf16.mxu0 0
          %1019 = vmatpush2.bf16.msra.mxu0 %v923
          %1020 = vmatprep.subr.bf16.mxu0 0
          %1021 = vmatpush2.bf16.msra.mxu0 %v922
          %1022 = vmatprep.subr.bf16.mxu0 0
          %1023 = vmatpush2.bf16.msra.mxu0 %v921
          %1024 = vmatprep.subr.bf16.mxu0 0
          %1025 = vmatpush2.bf16.msra.mxu0 %v920
          %1026 = vmatprep.subr.bf16.mxu0 0
          %1027 = vmatpush2.bf16.msra.mxu0 %v919
          %1028 = vmatprep.subr.bf16.mxu0 0
          %1029 = vmatpush2.bf16.msra.mxu0 %v918
          %1030 = vmatprep.mubr.bf16.mxu0 %v761
          %1031 = vmatmul.mubr.bf16.gmra.mxu0 %v760
          %v1032 = vpop.f32.mrf.mxu0
          %v1033 = vadd.f32 %v993, %v1032
          %v1034 = vpop.f32.mrf.mxu0
          %v1035 = vpop.f32.mrf.mxu0
          %v1036 = vpop.f32.mrf.mxu0
          %1037 = vdwg.mxu0
          %v1038 = vadd.f32 %v685, %v1033
          %1039 = vst [vmem:[#allocation2] sm:$0xff] %v1038
        $region76: #{tpu_custom_call.1} parent=59 // pred_fallthru
          _
        %p1040 = scmp.eq.s32.totalorder %s38, 1
        // Predicated region
        $region77: #{tpu_custom_call.1} parent=59 // pred_check
          %p1041 = pneg %p1040
        $region78: #{tpu_custom_call.1} parent=59 // pred_check_branch
          %1043 = sbr.rel (%p1041) target = $region80
        $region79: #{tpu_custom_call.1} parent=59 // pred_region
          %v1044 = vld [vmem:[#allocation2] sm:$0xff]
          %v1045 = vld [vmem:[%s3] sm:$0x1]
          %v1047 = vlaneseq
          %v1048 = vshrl.u32 %v1047, 7
          %v1049 = vsub.s32 0, %v1048
          %v1050 = vrot.slane %v1045, %v1049
          %v1052 = vadd.f32 %v1044, %v1050
          %v1053 = vmax.f32 %v1052, 0.0
          %v1054 = vpack.c.bf16 %v1053, %v1053
          %v1055 = vld [vmem:[%s4] sm:$0xf]
          %v1056 = vld [vmem:[%s4 + $0x4] sm:$0xf]
          %v1057 = vld [vmem:[%s4 + $0x8] sm:$0xf]
          %v1058 = vld [vmem:[%s4 + $0xc] sm:$0xf]
          %v1059 = vld [vmem:[%s4 + $0x10] sm:$0xf]
          %v1060 = vld [vmem:[%s4 + $0x14] sm:$0xf]
          %v1061 = vld [vmem:[%s4 + $0x18] sm:$0xf]
          %v1062 = vld [vmem:[%s4 + $0x1c] sm:$0xf]
          %v1063 = vld [vmem:[%s4 + $0x20] sm:$0xf]
          %v1064 = vld [vmem:[%s4 + $0x24] sm:$0xf]
          %v1065 = vld [vmem:[%s4 + $0x28] sm:$0xf]
          %v1066 = vld [vmem:[%s4 + $0x2c] sm:$0xf]
          %v1067 = vld [vmem:[%s4 + $0x30] sm:$0xf]
          %v1068 = vld [vmem:[%s4 + $0x34] sm:$0xf]
          %v1069 = vld [vmem:[%s4 + $0x38] sm:$0xf]
          %v1070 = vld [vmem:[%s4 + $0x3c] sm:$0xf]
          %v1071 = vld [vmem:[%s5] sm:$0x1]
          %v1073 = vlaneseq
          %v1074 = vshrl.u32 %v1073, 7
          %v1075 = vsub.s32 0, %v1074
          %v1076 = vrot.slane %v1071, %v1075
          %v1094 = vunpack.c.l.b16 %v1055
          %v1095 = vunpack.c.l.b16 %v1056
          %v1096 = vunpack.c.l.b16 %v1057
          %v1097 = vunpack.c.l.b16 %v1058
          %v1098 = vunpack.c.l.b16 %v1059
          %v1099 = vunpack.c.l.b16 %v1060
          %v1100 = vunpack.c.l.b16 %v1061
          %v1101 = vunpack.c.l.b16 %v1062
          %v1102 = vunpack.c.l.b16 %v1063
          %v1103 = vunpack.c.l.b16 %v1064
          %v1104 = vunpack.c.l.b16 %v1065
          %v1105 = vunpack.c.l.b16 %v1066
          %v1106 = vunpack.c.l.b16 %v1067
          %v1107 = vunpack.c.l.b16 %v1068
          %v1108 = vunpack.c.l.b16 %v1069
          %v1109 = vunpack.c.l.b16 %v1070
          %v1110 = vpack.c.b16 %v1095, %v1094
          %v1111 = vpack.c.b16 %v1097, %v1096
          %v1112 = vpack.c.b16 %v1099, %v1098
          %v1113 = vpack.c.b16 %v1101, %v1100
          %v1114 = vpack.c.b16 %v1103, %v1102
          %v1115 = vpack.c.b16 %v1105, %v1104
          %v1116 = vpack.c.b16 %v1107, %v1106
          %v1117 = vpack.c.b16 %v1109, %v1108
          %1126 = vmatprep.subr.bf16.mxu0 0
          %1127 = vmatpush1.bf16.msra.mxu0 %v1117
          %1128 = vmatprep.subr.bf16.mxu0 0
          %1129 = vmatpush1.bf16.msra.mxu0 %v1116
          %1130 = vmatprep.subr.bf16.mxu0 0
          %1131 = vmatpush1.bf16.msra.mxu0 %v1115
          %1132 = vmatprep.subr.bf16.mxu0 0
          %1133 = vmatpush1.bf16.msra.mxu0 %v1114
          %1134 = vmatprep.subr.bf16.mxu0 0
          %1135 = vmatpush1.bf16.msra.mxu0 %v1113
          %1136 = vmatprep.subr.bf16.mxu0 0
          %1137 = vmatpush1.bf16.msra.mxu0 %v1112
          %1138 = vmatprep.subr.bf16.mxu0 0
          %1139 = vmatpush1.bf16.msra.mxu0 %v1111
          %1140 = vmatprep.subr.bf16.mxu0 0
          %1141 = vmatpush1.bf16.msra.mxu0 %v1110
          %1142 = vmatprep.subr.bf16.mxu0 0
          %1143 = vmatpush2.bf16.msra.mxu0 0
          %1144 = vmatprep.subr.bf16.mxu0 0
          %1145 = vmatpush2.bf16.msra.mxu0 0
          %1146 = vmatprep.subr.bf16.mxu0 0
          %1147 = vmatpush2.bf16.msra.mxu0 0
          %1148 = vmatprep.subr.bf16.mxu0 0
          %1149 = vmatpush2.bf16.msra.mxu0 0
          %1150 = vmatprep.subr.bf16.mxu0 0
          %1151 = vmatpush2.bf16.msra.mxu0 0
          %1152 = vmatprep.subr.bf16.mxu0 0
          %1153 = vmatpush2.bf16.msra.mxu0 0
          %1154 = vmatprep.subr.bf16.mxu0 0
          %1155 = vmatpush2.bf16.msra.mxu0 0
          %1156 = vmatprep.subr.bf16.mxu0 0
          %1157 = vmatpush2.bf16.msra.mxu0 0
          %1158 = vmatprep.mubr.bf16.mxu0 0
          %1159 = vmatmul.mubr.bf16.gmra.mxu0 %v1054
          %v1160 = vpop.f32.mrf.mxu0
          %v1161 = vadd.f32 %v1076, %v1160
          %v1162 = vpop.f32.mrf.mxu0
          %v1163 = vpop.f32.mrf.mxu0
          %v1164 = vpop.f32.mrf.mxu0
          %1165 = vdwg.mxu0
          %v1166 = vmul.f32 %v1161, 0.5
          %v1167 = vmul.f32 %v1166, 1.442695
          %v1168 = vpow.pop %v1167
          %v1169 = vld [vmem:[%s649] sm:$0xff]
          %1171 = vrot.lane.b32.xlu0 %v1169, 8
          %v1172 = vpop.permute.xlu0 %1171
          %v1174 = vmul.f32 %v1168, %v1172
          %1176 = vrot.lane.b32.xlu0 %v1174, 120
          %v1177 = vpop.permute.xlu0 %1176
          %v1179 = vadd.f32 %v1161, %v1177
          %v1180 = vpack.c.bf16 %v1179, %v1179
          %v1181 = vld [vmem:[%s6] sm:$0xf]
          %v1182 = vld [vmem:[%s7] sm:$0x1]
          %v1184 = vlaneseq
          %v1185 = vshrl.u32 %v1184, 7
          %v1186 = vsub.s32 0, %v1185
          %v1187 = vrot.slane %v1182, %v1186
          %vm1189 = vcmask 64512
          %v1191 = vsel %vm1189, %v1180, 0
          %vm1193 = vcmask 1043456
          %v1195 = vsel %vm1193, %v1181, 0
          %1197 = vmatprep.subr.bf16.mxu0 0
          %1198 = vmatpush1.bf16.msra.mxu0 0
          %1199 = vmatprep.subr.bf16.mxu0 0
          %1200 = vmatpush1.bf16.msra.mxu0 0
          %1201 = vmatprep.subr.bf16.mxu0 0
          %1202 = vmatpush1.bf16.msra.mxu0 0
          %1203 = vmatprep.subr.bf16.mxu0 0
          %1204 = vmatpush1.bf16.msra.mxu0 0
          %1205 = vmatprep.subr.bf16.mxu0 0
          %1206 = vmatpush1.bf16.msra.mxu0 0
          %1207 = vmatprep.subr.bf16.mxu0 0
          %1208 = vmatpush1.bf16.msra.mxu0 0
          %1209 = vmatprep.subr.bf16.mxu0 0
          %1210 = vmatpush1.bf16.msra.mxu0 0
          %1211 = vmatprep.subr.bf16.mxu0 0
          %1212 = vmatpush1.bf16.msra.mxu0 %v1195
          %1213 = vmatprep.subr.bf16.mxu0 0
          %1214 = vmatpush2.bf16.msra.mxu0 0
          %1215 = vmatprep.subr.bf16.mxu0 0
          %1216 = vmatpush2.bf16.msra.mxu0 0
          %1217 = vmatprep.subr.bf16.mxu0 0
          %1218 = vmatpush2.bf16.msra.mxu0 0
          %1219 = vmatprep.subr.bf16.mxu0 0
          %1220 = vmatpush2.bf16.msra.mxu0 0
          %1221 = vmatprep.subr.bf16.mxu0 0
          %1222 = vmatpush2.bf16.msra.mxu0 0
          %1223 = vmatprep.subr.bf16.mxu0 0
          %1224 = vmatpush2.bf16.msra.mxu0 0
          %1225 = vmatprep.subr.bf16.mxu0 0
          %1226 = vmatpush2.bf16.msra.mxu0 0
          %1227 = vmatprep.subr.bf16.mxu0 0
          %1228 = vmatpush2.bf16.msra.mxu0 0
          %1229 = vmatprep.mubr.bf16.mxu0 0
          %1230 = vmatmul.mubr.bf16.gmra.mxu0 %v1191
          %v1231 = vpop.f32.mrf.mxu0
          %v1232 = vadd.f32 %v1187, %v1231
          %v1233 = vpop.f32.mrf.mxu0
          %v1234 = vpop.f32.mrf.mxu0
          %v1235 = vpop.f32.mrf.mxu0
          %1236 = vdwg.mxu0
          %v1237 = vmax.f32 %v1232, 0.0
          %v1238 = vpack.c.bf16 %v1237, %v1237
          %1239 = vst [vmem:[#allocation3] sm:$0xf] %v1238
          %s1240 = smul.u32 %s37, 8
          %v1241 = vlaneseq
          %v1242 = vshrl.u32 %v1241, 7
          %v1243 = vstv %s1240
          %v1244 = vadd.s32 %v1243, %v1242
          %vm1245 = vcmp.lt.s32.totalorder %v1244, 2
          %v1246 = vsel %vm1245, 1, 0
          %v1247 = vcvt.s32.f32 %v1246
          %v1248 = vadd.f32 %v1161, 1.0
          %v1249 = vmul.f32 %v1161, %v1161
          %1251 = vrot.lane.b32.xlu0 %v1249, 8
          %v1252 = vpop.permute.xlu0 %1251
          %v1254 = vsub.f32 %v1248, %v1252
          %v1255 = vmul.f32 %v1168, %v1168
          %v1256 = vsub.f32 %v1254, %v1255
          %1258 = vrot.lane.b32.xlu0 %v1256, 120
          %v1259 = vpop.permute.xlu0 %1258
          %v1261 = vsel %vm1189, %v1259, 0.0
          %1262 = vadd.xlane.f32.xlu0 %v1261
          %v1263 = vpop.xlane.xlu0 %1262
          %v1264 = vmul.f32 %v1263, %v1247
          %vm1265 = vcmask 130048
          %1266 = vst.msk [vmem:[#allocation10] sm:$0xff] %vm1265, %v1161
          %1268 = vrot.lane.b32.xlu0 %v1179, 16
          %v1269 = vpop.permute.xlu0 %1268
          %vm1271 = vcmask 195712
          %1272 = vst.msk [vmem:[#allocation10] sm:$0xff] %vm1271, %v1269
          %vm1273 = vcmask 212168
          %1274 = vst.msk [vmem:[#allocation10] sm:$0xff] %vm1273, %v1264
        $region80: #{tpu_custom_call.1} parent=59 // pred_fallthru
          _
        %p1275 = scmp.ge.s32.totalorder %s38, 2
        // Predicated region
        $region81: #{tpu_custom_call.1} parent=59 // pred_check
          %p1276 = pneg %p1275
        $region82: #{tpu_custom_call.1} parent=59 // pred_check_branch
          %1278 = sbr.rel (%p1276) target = $region84
        $region83: #{tpu_custom_call.1} parent=59 // pred_region
          %v1279 = vld [vmem:[#allocation3] sm:$0xf]
          %v1280 = vld [vmem:[%s536] sm:$0xff]
          %v1281 = vld [vmem:[%s536 + $0x8] sm:$0xff]
          %v1282 = vld [vmem:[%s536 + $0x10] sm:$0xff]
          %v1283 = vld [vmem:[%s536 + $0x18] sm:$0xff]
          %v1284 = vld [vmem:[%s536 + $0x20] sm:$0xff]
          %v1285 = vld [vmem:[%s536 + $0x28] sm:$0xff]
          %v1286 = vld [vmem:[%s536 + $0x30] sm:$0xff]
          %v1287 = vld [vmem:[%s536 + $0x38] sm:$0xff]
          %v1288 = vld [vmem:[%s536 + $0x40] sm:$0xff]
          %v1289 = vld [vmem:[%s536 + $0x48] sm:$0xff]
          %v1290 = vld [vmem:[%s536 + $0x50] sm:$0xff]
          %v1291 = vld [vmem:[%s536 + $0x58] sm:$0xff]
          %v1292 = vld [vmem:[%s536 + $0x60] sm:$0xff]
          %v1293 = vld [vmem:[%s536 + $0x68] sm:$0xff]
          %v1294 = vld [vmem:[%s536 + $0x70] sm:$0xff]
          %v1295 = vld [vmem:[%s536 + $0x78] sm:$0xff]
          %v1296 = vld [vmem:[%s536 + $0x80] sm:$0xff]
          %v1297 = vld [vmem:[%s536 + $0x88] sm:$0xff]
          %v1298 = vld [vmem:[%s536 + $0x90] sm:$0xff]
          %v1299 = vld [vmem:[%s536 + $0x98] sm:$0xff]
          %v1300 = vld [vmem:[%s536 + $0xa0] sm:$0xff]
          %v1301 = vld [vmem:[%s536 + $0xa8] sm:$0xff]
          %v1302 = vld [vmem:[%s536 + $0xb0] sm:$0xff]
          %v1303 = vld [vmem:[%s536 + $0xb8] sm:$0xff]
          %v1304 = vld [vmem:[%s536 + $0xc0] sm:$0xff]
          %v1305 = vld [vmem:[%s536 + $0xc8] sm:$0xff]
          %v1306 = vld [vmem:[%s536 + $0xd0] sm:$0xff]
          %v1307 = vld [vmem:[%s536 + $0xd8] sm:$0xff]
          %v1308 = vld [vmem:[%s536 + $0xe0] sm:$0xff]
          %v1309 = vld [vmem:[%s536 + $0xe8] sm:$0xff]
          %v1310 = vld [vmem:[%s536 + $0xf0] sm:$0xff]
          %v1311 = vld [vmem:[%s536 + $0xf8] sm:$0xff]
          %v1312 = vld [vmem:[%s663] sm:$0xf]
          %v1314 = vlaneseq
          %v1315 = vshrl.u32 %v1314, 7
          %v1316 = vsub.s32 0, %v1315
          %v1317 = vrot.slane %v1312, %v1316
          %v1318 = vlaneseq
          %v1319 = vshrl.u32 %v1318, 7
          %v1320 = vsub.s32 1, %v1319
          %v1321 = vrot.slane %v1312, %v1320
          %v1322 = vlaneseq
          %v1323 = vshrl.u32 %v1322, 7
          %v1324 = vsub.s32 2, %v1323
          %v1325 = vrot.slane %v1312, %v1324
          %v1326 = vlaneseq
          %v1327 = vshrl.u32 %v1326, 7
          %v1328 = vsub.s32 3, %v1327
          %v1329 = vrot.slane %v1312, %v1328
          %v1366 = vunpack.c.l.b16 %v1280
          %v1367 = vunpack.c.h.b16 %v1280
          %v1368 = vunpack.c.l.b16 %v1281
          %v1369 = vunpack.c.h.b16 %v1281
          %v1370 = vunpack.c.l.b16 %v1282
          %v1371 = vunpack.c.h.b16 %v1282
          %v1372 = vunpack.c.l.b16 %v1283
          %v1373 = vunpack.c.h.b16 %v1283
          %v1374 = vunpack.c.l.b16 %v1284
          %v1375 = vunpack.c.h.b16 %v1284
          %v1376 = vunpack.c.l.b16 %v1285
          %v1377 = vunpack.c.h.b16 %v1285
          %v1378 = vunpack.c.l.b16 %v1286
          %v1379 = vunpack.c.h.b16 %v1286
          %v1380 = vunpack.c.l.b16 %v1287
          %v1381 = vunpack.c.h.b16 %v1287
          %v1382 = vunpack.c.l.b16 %v1288
          %v1383 = vunpack.c.h.b16 %v1288
          %v1384 = vunpack.c.l.b16 %v1289
          %v1385 = vunpack.c.h.b16 %v1289
          %v1386 = vunpack.c.l.b16 %v1290
          %v1387 = vunpack.c.h.b16 %v1290
          %v1388 = vunpack.c.l.b16 %v1291
          %v1389 = vunpack.c.h.b16 %v1291
          %v1390 = vunpack.c.l.b16 %v1292
          %v1391 = vunpack.c.h.b16 %v1292
          %v1392 = vunpack.c.l.b16 %v1293
          %v1393 = vunpack.c.h.b16 %v1293
          %v1394 = vunpack.c.l.b16 %v1294
          %v1395 = vunpack.c.h.b16 %v1294
          %v1396 = vunpack.c.l.b16 %v1295
          %v1397 = vunpack.c.h.b16 %v1295
          %v1398 = vunpack.c.l.b16 %v1296
          %v1399 = vunpack.c.h.b16 %v1296
          %v1400 = vunpack.c.l.b16 %v1297
          %v1401 = vunpack.c.h.b16 %v1297
          %v1402 = vunpack.c.l.b16 %v1298
          %v1403 = vunpack.c.h.b16 %v1298
          %v1404 = vunpack.c.l.b16 %v1299
          %v1405 = vunpack.c.h.b16 %v1299
          %v1406 = vunpack.c.l.b16 %v1300
          %v1407 = vunpack.c.h.b16 %v1300
          %v1408 = vunpack.c.l.b16 %v1301
          %v1409 = vunpack.c.h.b16 %v1301
          %v1410 = vunpack.c.l.b16 %v1302
          %v1411 = vunpack.c.h.b16 %v1302
          %v1412 = vunpack.c.l.b16 %v1303
          %v1413 = vunpack.c.h.b16 %v1303
          %v1414 = vunpack.c.l.b16 %v1304
          %v1415 = vunpack.c.h.b16 %v1304
          %v1416 = vunpack.c.l.b16 %v1305
          %v1417 = vunpack.c.h.b16 %v1305
          %v1418 = vunpack.c.l.b16 %v1306
          %v1419 = vunpack.c.h.b16 %v1306
          %v1420 = vunpack.c.l.b16 %v1307
          %v1421 = vunpack.c.h.b16 %v1307
          %v1422 = vunpack.c.l.b16 %v1308
          %v1423 = vunpack.c.h.b16 %v1308
          %v1424 = vunpack.c.l.b16 %v1309
          %v1425 = vunpack.c.h.b16 %v1309
          %v1426 = vunpack.c.l.b16 %v1310
          %v1427 = vunpack.c.h.b16 %v1310
          %v1428 = vunpack.c.l.b16 %v1311
          %v1429 = vunpack.c.h.b16 %v1311
          %v1430 = vpack.c.b16 %v1370, %v1366
          %v1431 = vpack.c.b16 %v1371, %v1367
          %v1432 = vpack.c.b16 %v1372, %v1368
          %v1433 = vpack.c.b16 %v1373, %v1369
          %v1434 = vpack.c.b16 %v1378, %v1374
          %v1435 = vpack.c.b16 %v1379, %v1375
          %v1436 = vpack.c.b16 %v1380, %v1376
          %v1437 = vpack.c.b16 %v1381, %v1377
          %v1438 = vpack.c.b16 %v1386, %v1382
          %v1439 = vpack.c.b16 %v1387, %v1383
          %v1440 = vpack.c.b16 %v1388, %v1384
          %v1441 = vpack.c.b16 %v1389, %v1385
          %v1442 = vpack.c.b16 %v1394, %v1390
          %v1443 = vpack.c.b16 %v1395, %v1391
          %v1444 = vpack.c.b16 %v1396, %v1392
          %v1445 = vpack.c.b16 %v1397, %v1393
          %v1446 = vpack.c.b16 %v1402, %v1398
          %v1447 = vpack.c.b16 %v1403, %v1399
          %v1448 = vpack.c.b16 %v1404, %v1400
          %v1449 = vpack.c.b16 %v1405, %v1401
          %v1450 = vpack.c.b16 %v1410, %v1406
          %v1451 = vpack.c.b16 %v1411, %v1407
          %v1452 = vpack.c.b16 %v1412, %v1408
          %v1453 = vpack.c.b16 %v1413, %v1409
          %v1454 = vpack.c.b16 %v1418, %v1414
          %v1455 = vpack.c.b16 %v1419, %v1415
          %v1456 = vpack.c.b16 %v1420, %v1416
          %v1457 = vpack.c.b16 %v1421, %v1417
          %v1458 = vpack.c.b16 %v1426, %v1422
          %v1459 = vpack.c.b16 %v1427, %v1423
          %v1460 = vpack.c.b16 %v1428, %v1424
          %v1461 = vpack.c.b16 %v1429, %v1425
          %1494 = vmatprep.subr.bf16.mxu0 %v1459
          %1495 = vmatpush1.bf16.msra.mxu0 %v1458
          %1496 = vmatprep.subr.bf16.mxu0 %v1455
          %1497 = vmatpush1.bf16.msra.mxu0 %v1454
          %1498 = vmatprep.subr.bf16.mxu0 %v1451
          %1499 = vmatpush1.bf16.msra.mxu0 %v1450
          %1500 = vmatprep.subr.bf16.mxu0 %v1447
          %1501 = vmatpush1.bf16.msra.mxu0 %v1446
          %1502 = vmatprep.subr.bf16.mxu0 %v1443
          %1503 = vmatpush1.bf16.msra.mxu0 %v1442
          %1504 = vmatprep.subr.bf16.mxu0 %v1439
          %1505 = vmatpush1.bf16.msra.mxu0 %v1438
          %1506 = vmatprep.subr.bf16.mxu0 %v1435
          %1507 = vmatpush1.bf16.msra.mxu0 %v1434
          %1508 = vmatprep.subr.bf16.mxu0 %v1431
          %1509 = vmatpush1.bf16.msra.mxu0 %v1430
          %1510 = vmatprep.subr.bf16.mxu0 0
          %1511 = vmatpush2.bf16.msra.mxu0 0
          %1512 = vmatprep.subr.bf16.mxu0 0
          %1513 = vmatpush2.bf16.msra.mxu0 0
          %1514 = vmatprep.subr.bf16.mxu0 0
          %1515 = vmatpush2.bf16.msra.mxu0 0
          %1516 = vmatprep.subr.bf16.mxu0 0
          %1517 = vmatpush2.bf16.msra.mxu0 0
          %1518 = vmatprep.subr.bf16.mxu0 0
          %1519 = vmatpush2.bf16.msra.mxu0 0
          %1520 = vmatprep.subr.bf16.mxu0 0
          %1521 = vmatpush2.bf16.msra.mxu0 0
          %1522 = vmatprep.subr.bf16.mxu0 0
          %1523 = vmatpush2.bf16.msra.mxu0 0
          %1524 = vmatprep.subr.bf16.mxu0 0
          %1525 = vmatpush2.bf16.msra.mxu0 0
          %1526 = vmatprep.mubr.bf16.mxu0 0
          %1527 = vmatmul.mubr.bf16.gmra.mxu0 %v1279
          %v1528 = vpop.f32.mrf.mxu0
          %v1529 = vadd.f32 %v1317, %v1528
          %v1530 = vpop.f32.mrf.mxu0
          %v1531 = vadd.f32 %v1321, %v1530
          %v1532 = vpop.f32.mrf.mxu0
          %v1533 = vpop.f32.mrf.mxu0
          %1534 = vdwg.mxu0
          %1535 = vmatprep.subr.bf16.mxu0 %v1461
          %1536 = vmatpush1.bf16.msra.mxu0 %v1460
          %1537 = vmatprep.subr.bf16.mxu0 %v1457
          %1538 = vmatpush1.bf16.msra.mxu0 %v1456
          %1539 = vmatprep.subr.bf16.mxu0 %v1453
          %1540 = vmatpush1.bf16.msra.mxu0 %v1452
          %1541 = vmatprep.subr.bf16.mxu0 %v1449
          %1542 = vmatpush1.bf16.msra.mxu0 %v1448
          %1543 = vmatprep.subr.bf16.mxu0 %v1445
          %1544 = vmatpush1.bf16.msra.mxu0 %v1444
          %1545 = vmatprep.subr.bf16.mxu0 %v1441
          %1546 = vmatpush1.bf16.msra.mxu0 %v1440
          %1547 = vmatprep.subr.bf16.mxu0 %v1437
          %1548 = vmatpush1.bf16.msra.mxu0 %v1436
          %1549 = vmatprep.subr.bf16.mxu0 %v1433
          %1550 = vmatpush1.bf16.msra.mxu0 %v1432
          %1551 = vmatprep.subr.bf16.mxu0 0
          %1552 = vmatpush2.bf16.msra.mxu0 0
          %1553 = vmatprep.subr.bf16.mxu0 0
          %1554 = vmatpush2.bf16.msra.mxu0 0
          %1555 = vmatprep.subr.bf16.mxu0 0
          %1556 = vmatpush2.bf16.msra.mxu0 0
          %1557 = vmatprep.subr.bf16.mxu0 0
          %1558 = vmatpush2.bf16.msra.mxu0 0
          %1559 = vmatprep.subr.bf16.mxu0 0
          %1560 = vmatpush2.bf16.msra.mxu0 0
          %1561 = vmatprep.subr.bf16.mxu0 0
          %1562 = vmatpush2.bf16.msra.mxu0 0
          %1563 = vmatprep.subr.bf16.mxu0 0
          %1564 = vmatpush2.bf16.msra.mxu0 0
          %1565 = vmatprep.subr.bf16.mxu0 0
          %1566 = vmatpush2.bf16.msra.mxu0 0
          %1567 = vmatprep.mubr.bf16.mxu0 0
          %1568 = vmatmul.mubr.bf16.gmra.mxu0 %v1279
          %v1569 = vpop.f32.mrf.mxu0
          %v1570 = vadd.f32 %v1325, %v1569
          %v1571 = vpop.f32.mrf.mxu0
          %v1572 = vadd.f32 %v1329, %v1571
          %v1573 = vpop.f32.mrf.mxu0
          %v1574 = vpop.f32.mrf.mxu0
          %1575 = vdwg.mxu0
          %v1576 = vpack.c.bf16 %v1529, %v1529
          %v1577 = vpack.c.bf16 %v1531, %v1531
          %v1578 = vpack.c.bf16 %v1570, %v1570
          %v1579 = vpack.c.bf16 %v1572, %v1572
          %v1584 = vunpack.c.l.b16 %v1576
          %v1585 = vunpack.c.l.b16 %v1577
          %v1586 = vunpack.c.l.b16 %v1578
          %v1587 = vunpack.c.l.b16 %v1579
          %v1588 = vpack.c.b16 %v1585, %v1584
          %v1589 = vpack.c.b16 %v1587, %v1586
          %1592 = vst [vmem:[%s611] sm:$0xff] %v1588
          %1593 = vst [vmem:[%s611 + $0x8] sm:$0xff] %v1589
          %v1594 = vld [vmem:[%s632] sm:$0xff]
          %v1595 = vld [vmem:[%s632 + $0x8] sm:$0xff]
          %v1596 = vunpack.c.l.bf16 %v1594
          %v1597 = vunpack.c.h.bf16 %v1594
          %v1598 = vunpack.c.l.bf16 %v1595
          %v1599 = vunpack.c.h.bf16 %v1595
          %v1600 = vsub.f32 %v1529, %v1596
          %v1601 = vsub.f32 %v1531, %v1597
          %v1602 = vsub.f32 %v1570, %v1598
          %v1603 = vsub.f32 %v1572, %v1599
          %v1604 = vld [vmem:[#allocation4] sm:$0xff]
          %v1605 = vmul.f32 %v1600, %v1600
          %v1606 = vmul.f32 %v1601, %v1601
          %v1607 = vmul.f32 %v1602, %v1602
          %v1608 = vmul.f32 %v1603, %v1603
          %v1609 = vadd.f32 %v1605, %v1606
          %v1610 = vadd.f32 %v1609, %v1607
          %v1611 = vadd.f32 %v1610, %v1608
          %1612 = vadd.xlane.f32.xlu0 %v1611
          %v1613 = vpop.xlane.xlu0 %1612
          %v1614 = vadd.f32 %v1604, %v1613
          %vm1615 = vcmask 7168
          %1616 = vst.msk [vmem:[#allocation4] sm:$0xff] %vm1615, %v1614
        $region84: #{tpu_custom_call.1} parent=59 // pred_fallthru
          _
        %p1617 = scmp.eq.s32.totalorder %s38, 3
        // Predicated region
        $region85: #{tpu_custom_call.1} parent=59 // pred_check
          %p1618 = pneg %p1617
        $region86: #{tpu_custom_call.1} parent=59 // pred_check_branch
          %1620 = sbr.rel (%p1618) target = $region88
        $region87: #{tpu_custom_call.1} parent=59 // pred_region
          %s1621 = smul.u32 %s37, 8
          %v1622 = vlaneseq
          %v1623 = vshrl.u32 %v1622, 7
          %v1624 = vstv %s1621
          %v1625 = vadd.s32 %v1624, %v1623
          %vm1626 = vcmp.lt.s32.totalorder %v1625, 2
          %v1627 = vsel %vm1626, 1, 0
          %v1628 = vcvt.s32.f32 %v1627
          %v1629 = vld [vmem:[#allocation4] sm:$0xff]
          %v1630 = vmul.f32 %v1629, %v1628
          %1632 = vrot.lane.b32.xlu0 %v1630, 24
          %v1633 = vpop.permute.xlu0 %1632
          %vm1635 = vcmask 203968
          %1636 = vst.msk [vmem:[#allocation10] sm:$0xff] %vm1635, %v1633
        $region88: #{tpu_custom_call.1} parent=59 // pred_fallthru
          _
        %s1637 = sand.u32 %s364, 1
        %s1638 = scalar_lea.sflag [#allocation12], %s1637
        %s1639 = sand.u32 %s364, 1
        %s1640 = smul.addr %s1639, 16
        %s1641 = scalar_lea.vmem [#allocation11], %s1640
        // Predicated region
        $region89: #{tpu_custom_call.1} parent=59 // pred_check
          %p1642 = pneg %p340
        $region90: #{tpu_custom_call.1} parent=59 // pred_check_branch
          %1644 = sbr.rel (%p1642) target = $region92
        $region91: #{tpu_custom_call.1} parent=59 // pred_region
          %s1646 = ssub.s32 128, 128
          %1647 = vsyncadd [#allocation7], %s1646
          %s1648 = smul.addr %s37, 128
          %s1649 = scalar_lea.hbm %s10, %s1648
          %s1651 = sshll.u32 [#allocation10], 4
          %s1652 = int_to_ptr.vmem [resolvable:$true] %s1651
          %1654 = dma.vmem_to_hbm [thread:$0]  %s1652, 128, %s1649, [#allocation7]
        $region92: #{tpu_custom_call.1} parent=59 // pred_fallthru
          _
        // Predicated region
        $region93: #{tpu_custom_call.1} parent=59 // pred_check
          %p1655 = pneg %p374
        $region94: #{tpu_custom_call.1} parent=59 // pred_check_branch
          %1657 = sbr.rel (%p1655) target = $region96
        $region95: #{tpu_custom_call.1} parent=59 // pred_region
          %s1658 = ssub.s32 %s38, 2
          %p1659 = scmp.gt.s32.totalorder %s1658, 0
          %s1660 = scalar_select %p1659, %s1658, 0
          %s1661 = smul.u32 4, %s1660
          %s1663 = ssub.s32 256, 256
          %1664 = vsyncadd %s1638, %s1663
          %s1665 = smul.addr %s37, 8
          %s1666 = sadd.s32 %s1661, %s1665
          %s1667 = smul.addr %s1666, 64
          %s1668 = scalar_lea.hbm %s11, %s1667
          %s1670 = sshll.u32 %s1641, 4
          %s1671 = int_to_ptr.vmem [resolvable:$true] %s1670
          %1673 = dma.vmem_to_hbm [thread:$0]  %s1671, 256, %s1668, %s1638
        $region96: #{tpu_custom_call.1} parent=59 // pred_fallthru
          _
        // Predicated region
        $region97: #{tpu_custom_call.1} parent=59 // pred_check
          %p1674 = pneg %p340
        $region98: #{tpu_custom_call.1} parent=59 // pred_check_branch
          %1676 = sbr.rel (%p1674) target = $region100
        $region99: #{tpu_custom_call.1} parent=59 // pred_region
          %1677 = dma.done [#allocation7], 128
        $region100: #{tpu_custom_call.1} parent=59 // pred_fallthru
          _
      $region60: #{tpu_custom_call.1} parent=5 // pred_fallthru
        _
      %p1678 = scmp.le.s32.totalorder 2, %s28
      // Predicated region
      $region101: #{tpu_custom_call.1} parent=5 // pred_check
        %p1679 = pneg %p1678
      $region102: #{tpu_custom_call.1} parent=5 // pred_check_branch
        %1681 = sbr.rel (%p1679) target = $region104
      $region103: #{tpu_custom_call.1} parent=5 // pred_region
        %s1682 = ssub.s32 %s28, 2
        // Predicated region
        $region105: #{tpu_custom_call.1} parent=103 // pred_check
          %p1683 = pneg %p380
        $region106: #{tpu_custom_call.1} parent=103 // pred_check_branch
          %1685 = sbr.rel (%p1683) target = $region108
        $region107: #{tpu_custom_call.1} parent=103 // pred_region
          %s1686 = sand.u32 %s365, 1
          %s1687 = scalar_lea.sflag [#allocation12], %s1686
          %s1688 = sand.u32 %s365, 1
          %s1689 = smul.addr %s1688, 16
          %s1690 = scalar_lea.vmem [#allocation11], %s1689
          %1691 = dma.done %s1687, 256
        $region108: #{tpu_custom_call.1} parent=103 // pred_fallthru
          _
      $region104: #{tpu_custom_call.1} parent=5 // pred_fallthru
        _
    $region6: #{tpu_custom_call.1} parent=1 // loop_footer
      %s32 = sadd.s32 1, %s28
    $region7: #{tpu_custom_call.1} parent=1 // loop_footer_branch
      %27 = sbr.rel target = $region3
    $region8: #{tpu_custom_call.1} parent=1 // loop_exit
      _
    %1692 = vsyncpa [#allocation6], 1
    %s1693 = scalar_lea.sflag [#allocation6], 1
    %1694 = vsyncpa %s1693, 1
    %1695 = vsyncpa [#allocation9], 1
    %s1696 = scalar_lea.sflag [#allocation9], 1
    %1697 = vsyncpa %s1696, 1
    %1698 = vsyncpa [#allocation7], 1
    %s1699 = scalar_lea.sflag [#allocation7], 1
    %1700 = vsyncpa %s1699, 1
    %1701 = vsyncpa [#allocation12], 1
    %s1702 = scalar_lea.sflag [#allocation12], 1
    %1703 = vsyncpa %s1702, 1

</llo_original>
